<compile_context>
chip_gen: v7x
topology: tpu7x:2x2x1
jax: 0.10.0
libtpu: 0.0.40
codegen_flags: <defaults>
</compile_context>

<pallas_src>
import functools
import math

import jax
import jax.numpy as jnp
from jax import lax
from jax.experimental import pallas as pl
from jax.experimental.pallas import tpu as pltpu

# Fixed smoothing taps from the module's register_buffer (7-tap kernel, padding=3).
_TAPS = (0.0099, 0.0301, 0.0587, 0.0733, 0.0587, 0.0301, 0.0099)
_NEG_SLOPE = 0.1   # LeakyReLU slope


def _leaky_relu(v):
    return jnp.where(v >= 0, v, _NEG_SLOPE * v)


def _three_fc_kernel(x_ref, w1_ref, b1_ref, w2_ref, b2_ref, w3_ref, b3_ref,
                     o_ref, *, n_seq):
    """One grid step over a tile of batch_tile whole sequences (rows = batch_tile * n_seq)."""
    rows = x_ref.shape[1]

    # ---- merged fc1 / fc2 over the whole tile (feature-major results) ----
    xb = x_ref[0].astype(jnp.bfloat16)                          # (rows, d_in), cast in VMEM
    # NT matmul: contract the last dim of both operands -> (hid, rows).  Keeps features on
    # sublanes and the long row axis lane-dense; K=724 stays unpadded (Mosaic masks it).
    h1 = lax.dot_general(w1_ref[...], xb,
                         dimension_numbers=(((1,), (1,)), ((), ())),
                         preferred_element_type=jnp.float32)
    h1 = _leaky_relu(h1 + b1_ref[...])                          # (hid, rows) f32; dropout1 = id

    h2 = jnp.dot(w2_ref[...], h1.astype(jnp.bfloat16),
                 preferred_element_type=jnp.float32)
    h2 = _leaky_relu(h2 + b2_ref[...])                          # (hid2, rows) f32; dropout2 = id

    # ---- fc_out (out_features=1): VPU multiply + sublane reduce -> lane-dense row ----
    y = jnp.sum(h2 * w3_ref[...], axis=0, keepdims=True) + b3_ref[...]   # (1, rows) f32
    y = jnp.tanh(y)

    # ---- F.conv1d(..., padding=3) along the sequence axis, tile-wide ----
    # y is the flat concatenation of batch_tile sequences of length n_seq.  For tap offset d
    # the source index is p + d; the per-lane mask "does p+d stay inside the same sequence?"
    # implements both the zero padding and the batch boundaries, so the pltpu.roll
    # wraparound never leaks between sequences or across the row ends.
    pos = lax.broadcasted_iota(jnp.int32, (1, rows), 1)
    if n_seq & (n_seq - 1) == 0:
        pos_in_seq = jnp.bitwise_and(pos, n_seq - 1)
    else:
        pos_in_seq = lax.rem(pos, n_seq)

    acc = _TAPS[3] * y                                           # d = 0 tap needs no mask/roll
    for k, tap in enumerate(_TAPS):
        d = k - 3
        if d == 0:
            continue
        shifted = pltpu.roll(y, (-d) % rows, 1)                  # shifted[p] == y[p + d]
        valid = (pos_in_seq + d >= 0) & (pos_in_seq + d < n_seq)
        acc = acc + tap * jnp.where(valid, shifted, 0.0)

    o_ref[0] = acc                                               # one dense (1, rows) store


def _vmem_capacity_bytes():
    try:
        return int(pltpu.get_tpu_info().vmem_capacity_bytes)
    except Exception:
        return 64 * 1024 * 1024        # conservative (v7x-sized) fallback


def _pick_batch_tile(batch, n_seq, vmem_cap):
    """Whole-sequence batch tile sized per generation; keeps >=2 grid steps when possible."""
    # Row budget: ~8K rows on 128-MiB-VMEM parts (v5e/v6e), ~4K on 64-MiB parts (v7x).
    # x double-buffer (f32, 768 padded lanes): 8K rows ~= 48 MiB, 4K ~= 24 MiB.
    target_rows = 8192 if vmem_cap >= 96 * 1024 * 1024 else 4096
    max_bt = max(1, target_rows // n_seq)
    if batch >= 2:
        max_bt = min(max_bt, batch // 2)   # grid >= 2 steps so both v7x TensorCores stay busy
    best = 1
    for cand in range(1, min(batch, max_bt) + 1):
        if batch % cand == 0:
            best = cand
    # TODO(synk): prime batch sizes degrade to batch_tile=1 (many small grid steps); a ragged
    # last tile would remove that perf cliff but is not needed for correctness.
    return best


def three_fc_layer_forward(x, params, *, batch_tile=None):
    """x: (B, N, D_in) float32 -> (B, 1, N) float32, same as Three_FC_layer.forward (eval).

    params are torch-layout: w1 (hid, D_in), b1 (hid,), w2 (hid2, hid), b2 (hid2,),
    w3 (1, hid2), b3 (1,).
    """
    B, N, d_in = x.shape
    w1, b1, w2, b2, w3, b3 = params
    hid, hid2 = w1.shape[0], w2.shape[0]

    vmem_cap = _vmem_capacity_bytes()
    if batch_tile is None:
        batch_tile = _pick_batch_tile(B, N, vmem_cap)
    assert B % batch_tile == 0, (B, batch_tile)
    grid_len = B // batch_tile
    tile_rows = batch_tile * N

    # Free row-major reshape only -- no pad / transpose / cast of x in HBM.
    x3 = x.reshape(grid_len, tile_rows, d_in)

    # Tiny, VMEM-resident operands: MXU weights in bf16, everything else as f32 columns.
    w1b = jnp.asarray(w1).astype(jnp.bfloat16)                   # (hid, d_in)
    w2b = jnp.asarray(w2).astype(jnp.bfloat16)                   # (hid2, hid)
    b1c = jnp.asarray(b1, jnp.float32).reshape(hid, 1)
    b2c = jnp.asarray(b2, jnp.float32).reshape(hid2, 1)
    w3c = jnp.asarray(w3, jnp.float32).reshape(hid2, 1)
    b3c = jnp.asarray(b3, jnp.float32).reshape(1, 1)

    kernel = functools.partial(_three_fc_kernel, n_seq=N)
    out = pl.pallas_call(
        kernel,
        out_shape=jax.ShapeDtypeStruct((grid_len, 1, tile_rows), jnp.float32),
        grid=(grid_len,),
        in_specs=[
            # x tiles stream through the pipeline (double-buffered by BlockSpec).
            pl.BlockSpec((1, tile_rows, d_in), lambda i: (i, 0, 0)),
            # Weights / biases: constant block index -> fetched once, VMEM-resident.
            pl.BlockSpec((hid, d_in), lambda i: (0, 0)),
            pl.BlockSpec((hid, 1), lambda i: (0, 0)),
            pl.BlockSpec((hid2, hid), lambda i: (0, 0)),
            pl.BlockSpec((hid2, 1), lambda i: (0, 0)),
            pl.BlockSpec((hid2, 1), lambda i: (0, 0)),
            pl.BlockSpec((1, 1), lambda i: (0, 0)),
        ],
        out_specs=pl.BlockSpec((1, 1, tile_rows), lambda i: (i, 0, 0)),
        compiler_params=pltpu.CompilerParams(
            dimension_semantics=("parallel",),   # independent tiles (2 TCs on v7x)
            # 96 MiB on 128-MiB-VMEM parts (v5e/v6e), 40 MiB on v7x's 64 MiB.
            vmem_limit_bytes=(96 * 1024 * 1024 if vmem_cap >= 96 * 1024 * 1024
                              else 40 * 1024 * 1024),
        ),
    )(x3, w1b, b1c, w2b, b2c, w3c, b3c)
    return out.reshape(B, 1, N)


def _reference_forward(x, params):
    """Pure-JAX f32 reference of Three_FC_layer.forward (eval mode)."""
    w1, b1, w2, b2, w3, b3 = params
    h1 = _leaky_relu(x @ w1.T + b1)
    h2 = _leaky_relu(h1 @ w2.T + b2)
    y = jnp.tanh(h2 @ w3.T + b3)[..., 0]                      # (B, N)
    n = y.shape[1]
    yp = jnp.pad(y, ((0, 0), (3, 3)))
    out = sum(t * yp[:, k:k + n] for k, t in enumerate(_TAPS))
    return out[:, None, :]                                    # (B, 1, N)


def init_params(key, input_dim=724, hidden_dim=128):
    """Torch-layout params (weight: (out, in)), U(-1/sqrt(fan_in), +) like nn.Linear default."""
    dims = [(input_dim, hidden_dim),
            (hidden_dim, hidden_dim // 2),
            (hidden_dim // 2, 1)]
    params = []
    for fan_in, fan_out in dims:
        kw, kb, key = jax.random.split(key, 3)
        bound = 1.0 / math.sqrt(fan_in)
        w = jax.random.uniform(kw, (fan_out, fan_in), jnp.float32, -bound, bound)
        b = jax.random.uniform(kb, (fan_out,), jnp.float32, -bound, bound)
        params += [w, b]
    return params


if __name__ == "__main__":
    key = jax.random.PRNGKey(0)
    kx, kp = jax.random.split(key)

    # Shapes consistent with the module defaults (input_dim=724, hidden=128); N=128 keeps
    # the sequence lane-dense, batch_tile=2 exercises a 2-step pipelined grid.
    B, N, D_IN, HID = 4, 128, 724, 128
    x = jax.random.normal(kx, (B, N, D_IN), dtype=jnp.float32)
    params = init_params(kp, D_IN, HID)

    fwd = jax.jit(functools.partial(three_fc_layer_forward, batch_tile=2))
    out = jax.block_until_ready(fwd(x, params))
    assert out.shape == (B, 1, N), out.shape
    assert bool(jnp.all(jnp.isfinite(out)))

    ref = _reference_forward(x, params)
    max_err = float(jnp.max(jnp.abs(out - ref)))
    assert max_err < 2e-2, f"max abs error vs reference: {max_err}"

    print("KERNEL_OK")
</pallas_src>

<mosaic_0001>
module attributes {stable_mosaic.version = 11 : i64} {
  func.func @_three_fc_kernel(%arg0: i32, %arg1: memref<1x256x724xf32, #tpu.memory_space<vmem>>, %arg2: memref<128x724xbf16, #tpu.memory_space<vmem>>, %arg3: memref<128x1xf32, #tpu.memory_space<vmem>>, %arg4: memref<64x128xbf16, #tpu.memory_space<vmem>>, %arg5: memref<64x1xf32, #tpu.memory_space<vmem>>, %arg6: memref<64x1xf32, #tpu.memory_space<vmem>>, %arg7: memref<1x1xf32, #tpu.memory_space<vmem>>, %arg8: memref<1x1x256xf32, #tpu.memory_space<vmem>>) attributes {dimension_semantics = [#tpu.dimension_semantics<parallel>], iteration_bounds = array<i64: 2>, scalar_prefetch = 0 : i64, scratch_operands = 0 : i64, tpu.core_type = #tpu.core_type<tc>, window_params = [{transform_indices = @transform_0, window_bounds = array<i64: 1, 256, 724>}, {pipeline_mode = #tpu.pipeline_mode<synchronous>, transform_indices = @transform_1, window_bounds = array<i64: 128, 724>}, {pipeline_mode = #tpu.pipeline_mode<synchronous>, transform_indices = @transform_2, window_bounds = array<i64: 128, 1>}, {pipeline_mode = #tpu.pipeline_mode<synchronous>, transform_indices = @transform_3, window_bounds = array<i64: 64, 128>}, {pipeline_mode = #tpu.pipeline_mode<synchronous>, transform_indices = @transform_4, window_bounds = array<i64: 64, 1>}, {pipeline_mode = #tpu.pipeline_mode<synchronous>, transform_indices = @transform_5, window_bounds = array<i64: 64, 1>}, {pipeline_mode = #tpu.pipeline_mode<synchronous>, transform_indices = @transform_6, window_bounds = array<i64: 1, 1>}, {transform_indices = @transform_7, window_bounds = array<i64: 1, 1, 256>}]} {
    %c0 = arith.constant 0 : index
    %c0_0 = arith.constant 0 : index
    %c0_1 = arith.constant 0 : index
    %0 = vector.load %arg1[%c0, %c0_0, %c0_1] : memref<1x256x724xf32, #tpu.memory_space<vmem>>, vector<1x256x724xf32>
    %1 = vector.shape_cast %0 : vector<1x256x724xf32> to vector<256x724xf32>
    %2 = arith.truncf %1 : vector<256x724xf32> to vector<256x724xbf16>
    %c0_2 = arith.constant 0 : index
    %c0_3 = arith.constant 0 : index
    %3 = vector.load %arg2[%c0_2, %c0_3] : memref<128x724xbf16, #tpu.memory_space<vmem>>, vector<128x724xbf16>
    %cst = arith.constant dense<0.000000e+00> : vector<128x256xf32>
    %4 = tpu.matmul %3, %2, %cst {dimension_numbers = #tpu.dot_dimension_numbers<[1], [1], [0], [0], [0, 0, 1, 0], [], []>} : vector<128x724xbf16>, vector<256x724xbf16>, vector<128x256xf32> -> vector<128x256xf32>
    %c0_4 = arith.constant 0 : index
    %c0_5 = arith.constant 0 : index
    %5 = vector.load %arg3[%c0_4, %c0_5] : memref<128x1xf32, #tpu.memory_space<vmem>>, vector<128x1xf32>
    %6 = vector.broadcast %5 : vector<128x1xf32> to vector<128x256xf32>
    %7 = arith.addf %4, %6 : vector<128x256xf32>
    %cst_6 = arith.constant 0.000000e+00 : f32
    %8 = vector.broadcast %cst_6 : f32 to vector<128x256xf32>
    %9 = arith.cmpf oge, %7, %8 : vector<128x256xf32>
    %cst_7 = arith.constant 1.000000e-01 : f32
    %10 = vector.broadcast %cst_7 : f32 to vector<128x256xf32>
    %11 = arith.mulf %10, %7 : vector<128x256xf32>
    %12 = arith.select %9, %7, %11 : vector<128x256xi1>, vector<128x256xf32>
    %c0_8 = arith.constant 0 : index
    %c0_9 = arith.constant 0 : index
    %13 = vector.load %arg4[%c0_8, %c0_9] : memref<64x128xbf16, #tpu.memory_space<vmem>>, vector<64x128xbf16>
    %14 = arith.truncf %12 : vector<128x256xf32> to vector<128x256xbf16>
    %cst_10 = arith.constant dense<0.000000e+00> : vector<64x256xf32>
    %15 = tpu.matmul %13, %14, %cst_10 {dimension_numbers = #tpu.dot_dimension_numbers<[1], [0], [0], [1], [0, 0, 1, 1], [], []>} : vector<64x128xbf16>, vector<128x256xbf16>, vector<64x256xf32> -> vector<64x256xf32>
    %c0_11 = arith.constant 0 : index
    %c0_12 = arith.constant 0 : index
    %16 = vector.load %arg5[%c0_11, %c0_12] : memref<64x1xf32, #tpu.memory_space<vmem>>, vector<64x1xf32>
    %17 = vector.broadcast %16 : vector<64x1xf32> to vector<64x256xf32>
    %18 = arith.addf %15, %17 : vector<64x256xf32>
    %cst_13 = arith.constant 0.000000e+00 : f32
    %19 = vector.broadcast %cst_13 : f32 to vector<64x256xf32>
    %20 = arith.cmpf oge, %18, %19 : vector<64x256xf32>
    %cst_14 = arith.constant 1.000000e-01 : f32
    %21 = vector.broadcast %cst_14 : f32 to vector<64x256xf32>
    %22 = arith.mulf %21, %18 : vector<64x256xf32>
    %23 = arith.select %20, %18, %22 : vector<64x256xi1>, vector<64x256xf32>
    %c0_15 = arith.constant 0 : index
    %c0_16 = arith.constant 0 : index
    %24 = vector.load %arg6[%c0_15, %c0_16] : memref<64x1xf32, #tpu.memory_space<vmem>>, vector<64x1xf32>
    %25 = vector.broadcast %24 : vector<64x1xf32> to vector<64x256xf32>
    %26 = arith.mulf %23, %25 : vector<64x256xf32>
    %cst_17 = arith.constant dense<0.000000e+00> : vector<256xf32>
    %27 = vector.multi_reduction <add>, %26, %cst_17 [0] : vector<64x256xf32> to vector<256xf32>
    %28 = vector.shape_cast %27 : vector<256xf32> to vector<1x256xf32>
    %c0_18 = arith.constant 0 : index
    %c0_19 = arith.constant 0 : index
    %29 = vector.load %arg7[%c0_18, %c0_19] : memref<1x1xf32, #tpu.memory_space<vmem>>, vector<1x1xf32>
    %30 = vector.broadcast %29 : vector<1x1xf32> to vector<1x256xf32>
    %31 = arith.addf %28, %30 : vector<1x256xf32>
    %32 = math.tanh %31 : vector<1x256xf32>
    %33 = tpu.iota {dimensions = array<i32: 1>} : vector<1x256xi32>
    %c127_i32 = arith.constant 127 : i32
    %34 = vector.broadcast %c127_i32 : i32 to vector<1x256xi32>
    %35 = arith.andi %33, %34 : vector<1x256xi32>
    %cst_20 = arith.constant 7.330000e-02 : f32
    %36 = vector.broadcast %cst_20 : f32 to vector<1x256xf32>
    %37 = arith.mulf %36, %32 : vector<1x256xf32>
    %c3_i32 = arith.constant 3 : i32
    %38 = tpu.dynamic_rotate %32 by %c3_i32 dim 1 : vector<1x256xf32>, i32 -> vector<1x256xf32>
    %c-3_i32 = arith.constant -3 : i32
    %39 = vector.broadcast %c-3_i32 : i32 to vector<1x256xi32>
    %40 = arith.addi %35, %39 : vector<1x256xi32>
    %c0_i32 = arith.constant 0 : i32
    %41 = vector.broadcast %c0_i32 : i32 to vector<1x256xi32>
    %42 = arith.cmpi sge, %40, %41 : vector<1x256xi32>
    %c-3_i32_21 = arith.constant -3 : i32
    %43 = vector.broadcast %c-3_i32_21 : i32 to vector<1x256xi32>
    %44 = arith.addi %35, %43 : vector<1x256xi32>
    %c128_i32 = arith.constant 128 : i32
    %45 = vector.broadcast %c128_i32 : i32 to vector<1x256xi32>
    %46 = arith.cmpi slt, %44, %45 : vector<1x256xi32>
    %47 = arith.andi %42, %46 : vector<1x256xi1>
    %cst_22 = arith.constant 0.000000e+00 : f32
    %48 = vector.broadcast %cst_22 : f32 to vector<1x256xf32>
    %49 = arith.select %47, %38, %48 : vector<1x256xi1>, vector<1x256xf32>
    %cst_23 = arith.constant 0.00989999994 : f32
    %50 = vector.broadcast %cst_23 : f32 to vector<1x256xf32>
    %51 = arith.mulf %50, %49 : vector<1x256xf32>
    %52 = arith.addf %37, %51 : vector<1x256xf32>
    %c2_i32 = arith.constant 2 : i32
    %53 = tpu.dynamic_rotate %32 by %c2_i32 dim 1 : vector<1x256xf32>, i32 -> vector<1x256xf32>
    %c-2_i32 = arith.constant -2 : i32
    %54 = vector.broadcast %c-2_i32 : i32 to vector<1x256xi32>
    %55 = arith.addi %35, %54 : vector<1x256xi32>
    %c0_i32_24 = arith.constant 0 : i32
    %56 = vector.broadcast %c0_i32_24 : i32 to vector<1x256xi32>
    %57 = arith.cmpi sge, %55, %56 : vector<1x256xi32>
    %c-2_i32_25 = arith.constant -2 : i32
    %58 = vector.broadcast %c-2_i32_25 : i32 to vector<1x256xi32>
    %59 = arith.addi %35, %58 : vector<1x256xi32>
    %c128_i32_26 = arith.constant 128 : i32
    %60 = vector.broadcast %c128_i32_26 : i32 to vector<1x256xi32>
    %61 = arith.cmpi slt, %59, %60 : vector<1x256xi32>
    %62 = arith.andi %57, %61 : vector<1x256xi1>
    %cst_27 = arith.constant 0.000000e+00 : f32
    %63 = vector.broadcast %cst_27 : f32 to vector<1x256xf32>
    %64 = arith.select %62, %53, %63 : vector<1x256xi1>, vector<1x256xf32>
    %cst_28 = arith.constant 3.010000e-02 : f32
    %65 = vector.broadcast %cst_28 : f32 to vector<1x256xf32>
    %66 = arith.mulf %65, %64 : vector<1x256xf32>
    %67 = arith.addf %52, %66 : vector<1x256xf32>
    %c1_i32 = arith.constant 1 : i32
    %68 = tpu.dynamic_rotate %32 by %c1_i32 dim 1 : vector<1x256xf32>, i32 -> vector<1x256xf32>
    %c-1_i32 = arith.constant -1 : i32
    %69 = vector.broadcast %c-1_i32 : i32 to vector<1x256xi32>
    %70 = arith.addi %35, %69 : vector<1x256xi32>
    %c0_i32_29 = arith.constant 0 : i32
    %71 = vector.broadcast %c0_i32_29 : i32 to vector<1x256xi32>
    %72 = arith.cmpi sge, %70, %71 : vector<1x256xi32>
    %c-1_i32_30 = arith.constant -1 : i32
    %73 = vector.broadcast %c-1_i32_30 : i32 to vector<1x256xi32>
    %74 = arith.addi %35, %73 : vector<1x256xi32>
    %c128_i32_31 = arith.constant 128 : i32
    %75 = vector.broadcast %c128_i32_31 : i32 to vector<1x256xi32>
    %76 = arith.cmpi slt, %74, %75 : vector<1x256xi32>
    %77 = arith.andi %72, %76 : vector<1x256xi1>
    %cst_32 = arith.constant 0.000000e+00 : f32
    %78 = vector.broadcast %cst_32 : f32 to vector<1x256xf32>
    %79 = arith.select %77, %68, %78 : vector<1x256xi1>, vector<1x256xf32>
    %cst_33 = arith.constant 5.870000e-02 : f32
    %80 = vector.broadcast %cst_33 : f32 to vector<1x256xf32>
    %81 = arith.mulf %80, %79 : vector<1x256xf32>
    %82 = arith.addf %67, %81 : vector<1x256xf32>
    %c255_i32 = arith.constant 255 : i32
    %83 = tpu.dynamic_rotate %32 by %c255_i32 dim 1 : vector<1x256xf32>, i32 -> vector<1x256xf32>
    %c1_i32_34 = arith.constant 1 : i32
    %84 = vector.broadcast %c1_i32_34 : i32 to vector<1x256xi32>
    %85 = arith.addi %35, %84 : vector<1x256xi32>
    %c0_i32_35 = arith.constant 0 : i32
    %86 = vector.broadcast %c0_i32_35 : i32 to vector<1x256xi32>
    %87 = arith.cmpi sge, %85, %86 : vector<1x256xi32>
    %c1_i32_36 = arith.constant 1 : i32
    %88 = vector.broadcast %c1_i32_36 : i32 to vector<1x256xi32>
    %89 = arith.addi %35, %88 : vector<1x256xi32>
    %c128_i32_37 = arith.constant 128 : i32
    %90 = vector.broadcast %c128_i32_37 : i32 to vector<1x256xi32>
    %91 = arith.cmpi slt, %89, %90 : vector<1x256xi32>
    %92 = arith.andi %87, %91 : vector<1x256xi1>
    %cst_38 = arith.constant 0.000000e+00 : f32
    %93 = vector.broadcast %cst_38 : f32 to vector<1x256xf32>
    %94 = arith.select %92, %83, %93 : vector<1x256xi1>, vector<1x256xf32>
    %cst_39 = arith.constant 5.870000e-02 : f32
    %95 = vector.broadcast %cst_39 : f32 to vector<1x256xf32>
    %96 = arith.mulf %95, %94 : vector<1x256xf32>
    %97 = arith.addf %82, %96 : vector<1x256xf32>
    %c254_i32 = arith.constant 254 : i32
    %98 = tpu.dynamic_rotate %32 by %c254_i32 dim 1 : vector<1x256xf32>, i32 -> vector<1x256xf32>
    %c2_i32_40 = arith.constant 2 : i32
    %99 = vector.broadcast %c2_i32_40 : i32 to vector<1x256xi32>
    %100 = arith.addi %35, %99 : vector<1x256xi32>
    %c0_i32_41 = arith.constant 0 : i32
    %101 = vector.broadcast %c0_i32_41 : i32 to vector<1x256xi32>
    %102 = arith.cmpi sge, %100, %101 : vector<1x256xi32>
    %c2_i32_42 = arith.constant 2 : i32
    %103 = vector.broadcast %c2_i32_42 : i32 to vector<1x256xi32>
    %104 = arith.addi %35, %103 : vector<1x256xi32>
    %c128_i32_43 = arith.constant 128 : i32
    %105 = vector.broadcast %c128_i32_43 : i32 to vector<1x256xi32>
    %106 = arith.cmpi slt, %104, %105 : vector<1x256xi32>
    %107 = arith.andi %102, %106 : vector<1x256xi1>
    %cst_44 = arith.constant 0.000000e+00 : f32
    %108 = vector.broadcast %cst_44 : f32 to vector<1x256xf32>
    %109 = arith.select %107, %98, %108 : vector<1x256xi1>, vector<1x256xf32>
    %cst_45 = arith.constant 3.010000e-02 : f32
    %110 = vector.broadcast %cst_45 : f32 to vector<1x256xf32>
    %111 = arith.mulf %110, %109 : vector<1x256xf32>
    %112 = arith.addf %97, %111 : vector<1x256xf32>
    %c253_i32 = arith.constant 253 : i32
    %113 = tpu.dynamic_rotate %32 by %c253_i32 dim 1 : vector<1x256xf32>, i32 -> vector<1x256xf32>
    %c3_i32_46 = arith.constant 3 : i32
    %114 = vector.broadcast %c3_i32_46 : i32 to vector<1x256xi32>
    %115 = arith.addi %35, %114 : vector<1x256xi32>
    %c0_i32_47 = arith.constant 0 : i32
    %116 = vector.broadcast %c0_i32_47 : i32 to vector<1x256xi32>
    %117 = arith.cmpi sge, %115, %116 : vector<1x256xi32>
    %c3_i32_48 = arith.constant 3 : i32
    %118 = vector.broadcast %c3_i32_48 : i32 to vector<1x256xi32>
    %119 = arith.addi %35, %118 : vector<1x256xi32>
    %c128_i32_49 = arith.constant 128 : i32
    %120 = vector.broadcast %c128_i32_49 : i32 to vector<1x256xi32>
    %121 = arith.cmpi slt, %119, %120 : vector<1x256xi32>
    %122 = arith.andi %117, %121 : vector<1x256xi1>
    %cst_50 = arith.constant 0.000000e+00 : f32
    %123 = vector.broadcast %cst_50 : f32 to vector<1x256xf32>
    %124 = arith.select %122, %113, %123 : vector<1x256xi1>, vector<1x256xf32>
    %cst_51 = arith.constant 0.00989999994 : f32
    %125 = vector.broadcast %cst_51 : f32 to vector<1x256xf32>
    %126 = arith.mulf %125, %124 : vector<1x256xf32>
    %127 = arith.addf %112, %126 : vector<1x256xf32>
    %c0_52 = arith.constant 0 : index
    %c0_53 = arith.constant 0 : index
    %c0_54 = arith.constant 0 : index
    %128 = vector.load %arg8[%c0_52, %c0_53, %c0_54] : memref<1x1x256xf32, #tpu.memory_space<vmem>>, vector<1x1x256xf32>
    %129 = vector.shape_cast %128 : vector<1x1x256xf32> to vector<1x256xf32>
    %130 = vector.shape_cast %127 : vector<1x256xf32> to vector<1x1x256xf32>
    tpu.vector_store %arg8[%c0_52, %c0_53, %c0_54], %130 {strides = array<i32>} : memref<1x1x256xf32, #tpu.memory_space<vmem>>, vector<1x1x256xf32>,
    return
  }
  func.func @transform_0(%arg0: i32) -> (i32, i32, i32) {
    %c0_i32 = arith.constant 0 : i32
    %c0_i32_0 = arith.constant 0 : i32
    %c0_i32_1 = arith.constant 0 : i32
    return %arg0, %c0_i32, %c0_i32_0 : i32, i32, i32
  }
  func.func @transform_1(%arg0: i32) -> (i32, i32) {
    %c0_i32 = arith.constant 0 : i32
    %c0_i32_0 = arith.constant 0 : i32
    %c0_i32_1 = arith.constant 0 : i32
    return %c0_i32, %c0_i32_0 : i32, i32
  }
  func.func @transform_2(%arg0: i32) -> (i32, i32) {
    %c0_i32 = arith.constant 0 : i32
    %c0_i32_0 = arith.constant 0 : i32
    %c0_i32_1 = arith.constant 0 : i32
    return %c0_i32, %c0_i32_0 : i32, i32
  }
  func.func @transform_3(%arg0: i32) -> (i32, i32) {
    %c0_i32 = arith.constant 0 : i32
    %c0_i32_0 = arith.constant 0 : i32
    %c0_i32_1 = arith.constant 0 : i32
    return %c0_i32, %c0_i32_0 : i32, i32
  }
  func.func @transform_4(%arg0: i32) -> (i32, i32) {
    %c0_i32 = arith.constant 0 : i32
    %c0_i32_0 = arith.constant 0 : i32
    %c0_i32_1 = arith.constant 0 : i32
    return %c0_i32, %c0_i32_0 : i32, i32
  }
  func.func @transform_5(%arg0: i32) -> (i32, i32) {
    %c0_i32 = arith.constant 0 : i32
    %c0_i32_0 = arith.constant 0 : i32
    %c0_i32_1 = arith.constant 0 : i32
    return %c0_i32, %c0_i32_0 : i32, i32
  }
  func.func @transform_6(%arg0: i32) -> (i32, i32) {
    %c0_i32 = arith.constant 0 : i32
    %c0_i32_0 = arith.constant 0 : i32
    %c0_i32_1 = arith.constant 0 : i32
    return %c0_i32, %c0_i32_0 : i32, i32
  }
  func.func @transform_7(%arg0: i32) -> (i32, i32, i32) {
    %c0_i32 = arith.constant 0 : i32
    %c0_i32_0 = arith.constant 0 : i32
    %c0_i32_1 = arith.constant 0 : i32
    return %arg0, %c0_i32, %c0_i32_0 : i32, i32, i32
  }
}

</mosaic_0001>

<llo_original>
// kernel: three_fc_layer_forward.1
$region0: #{three_fc_layer_forward.1}
  #allocation0 [shape = 'u32[]', space=smem, size = 0x4, offset = 0x4, fixed_abs, tag = 'smem constant byte address 0x4 - core index']
  #allocation1 [shape = 'u32[144,128]{1,0:T(1,128)}', space=vmem, size = 0x12000, scoped, tag = 'internal scratch']
  #allocation2 [shape = 'f32[1,1]{1,0:T(1,128)S(1)}', space=vmem, size = 0x200, scoped, tag = 'scoped memory for three_fc_layer_forward.1']
  %s0 = inlined_call_operand.vmem [shape: f32[2,256,724], index: 0, kind: input, shape index: {}]
  %s1 = inlined_call_operand.vmem [shape: bf16[128,724], index: 1, kind: input, shape index: {}]
  %s2 = inlined_call_operand.vmem [shape: f32[128,1], index: 2, kind: input, shape index: {}]
  %s3 = inlined_call_operand.vmem [shape: bf16[64,128], index: 3, kind: input, shape index: {}]
  %s4 = inlined_call_operand.vmem [shape: f32[64,1], index: 4, kind: input, shape index: {}]
  %s5 = inlined_call_operand.vmem [shape: f32[64,1], index: 5, kind: input, shape index: {}]
  %s6 = inlined_call_operand.<no memory space> [shape: f32[1,1], index: 6, kind: input, shape index: {}]
  %s7 = inlined_call_operand.hbm [shape: f32[2,1,256], index: 7, kind: output, shape index: {}]
  %s8 = sld [smem:[#allocation0]]
  $region61: #{three_fc_layer_forward.1} parent=0
    _
  %s10 = ssub.s32 1, %s8
  %s11 = scalar_select 0, %s10, %s8
  %v12 = vstv %s6
  %13 = vst [vmem:[#allocation2] sm:$0x1] %v12
  $region1: #{three_fc_layer_forward.1} parent=0
    #allocation3 [shape = 'u8[2048]{0}', space=vmem, size = 0x800, scoped, tag = 'output window, operand 0']
    #allocation4 [shape = 's32[2]{0}', space=sflag, size = 0x8, scoped, tag = 'scoped memory for three_fc_layer_forward.1']
    %14 = vsyncpa [#allocation4], 0
    %s15 = scalar_lea.sflag [#allocation4], 1
    %16 = vsyncpa %s15, 0
    loop: start=0, step=1, limit=4
    $region2: #{three_fc_layer_forward.1} parent=1 // loop_pre_header
      _
    $region3: #{three_fc_layer_forward.1} parent=1 // loop_header
      %s18 = sphi 0, %s22
      %p19 = scmp.ge.s32.totalorder %s18, 4
      %s28 = sphi 0, %s30
      %s31 = sphi 0, %s28
      %s32 = sphi 0, %s31
      %s48 = sphi 0, %s32
      %s52 = sphi 0, %s52
      %s54 = sphi 0, %s52
      %s55 = sphi 0, %s54
      %s69 = sphi 0, %s55
      %s73 = sphi 0, %s73
      %s75 = sphi 0, %s73
      %s76 = sphi 0, %s75
      %s90 = sphi 0, %s76
      %s94 = sphi 0, %s94
      %s96 = sphi 0, %s94
      %s97 = sphi 0, %s96
      %s111 = sphi 0, %s97
      %s115 = sphi 0, %s115
      %s117 = sphi 0, %s115
      %s118 = sphi 0, %s117
      %s132 = sphi 0, %s118
      %s136 = sphi 0, %s136
      %s138 = sphi 0, %s136
      %s139 = sphi 0, %s138
      %s153 = sphi 0, %s139
      %s157 = sphi 0, %s157
      %s159 = sphi 0, %s157
      %s160 = sphi 0, %s159
      %s174 = sphi 0, %s160
      %s180 = sphi 0, %s182
      %s183 = sphi 0, %s180
      %s184 = sphi 0, %s183
      %s200 = sphi 0, %s184
    $region4: #{three_fc_layer_forward.1} parent=1 // loop_header_branch
      %21 = sbr.rel (%p19) target = $region8
    $region5: #{three_fc_layer_forward.1} parent=1 // loop_body
      %s23 = ssub.s32 %s18, 1
      %s24 = ssub.s32 %s18, 2
      %s25 = sadd.s32 %s18, 1
      %s26 = ssub.s32 %s18, %s25
      %p27 = scmp.eq.s32.totalorder %s26, 0
      %s29 = sadd.s32 %s28, 1
      %s30 = scalar_select %p27, %s28, %s29
      %p33 = pneg %p27
      %p34 = scmp.eq.s32.totalorder %s18, 1
      %p35 = por %p33, %p34
      %p36 = scmp.ne.s32.totalorder %s28, %s31
      %p37 = scmp.eq.s32.totalorder %s18, 0
      %p38 = por %p36, %p37
      %p39 = scmp.ne.s32.totalorder %s28, %s31
      %p40 = scmp.eq.s32.totalorder %s23, 1
      %p41 = por %p39, %p40
      %p42 = scmp.ne.s32.totalorder %s31, %s32
      %p43 = scmp.eq.s32.totalorder %s23, 0
      %p44 = por %p42, %p43
      %p45 = scmp.ne.s32.totalorder %s31, %s32
      %p46 = scmp.eq.s32.totalorder %s24, 1
      %p47 = por %p45, %p46
      %p49 = scmp.ne.s32.totalorder %s32, %s48
      %p50 = scmp.eq.s32.totalorder %s24, 0
      %p51 = por %p49, %p50
      %s53 = sadd.s32 %s52, 1
      %p56 = scmp.eq.s32.totalorder %s18, 1
      %p57 = scmp.ne.s32.totalorder %s52, %s54
      %p58 = scmp.eq.s32.totalorder %s18, 0
      %p59 = por %p57, %p58
      %p60 = scmp.ne.s32.totalorder %s52, %s54
      %p61 = scmp.eq.s32.totalorder %s23, 1
      %p62 = por %p60, %p61
      %p63 = scmp.ne.s32.totalorder %s54, %s55
      %p64 = scmp.eq.s32.totalorder %s23, 0
      %p65 = por %p63, %p64
      %p66 = scmp.ne.s32.totalorder %s54, %s55
      %p67 = scmp.eq.s32.totalorder %s24, 1
      %p68 = por %p66, %p67
      %p70 = scmp.ne.s32.totalorder %s55, %s69
      %p71 = scmp.eq.s32.totalorder %s24, 0
      %p72 = por %p70, %p71
      %s74 = sadd.s32 %s73, 1
      %p77 = scmp.eq.s32.totalorder %s18, 1
      %p78 = scmp.ne.s32.totalorder %s73, %s75
      %p79 = scmp.eq.s32.totalorder %s18, 0
      %p80 = por %p78, %p79
      %p81 = scmp.ne.s32.totalorder %s73, %s75
      %p82 = scmp.eq.s32.totalorder %s23, 1
      %p83 = por %p81, %p82
      %p84 = scmp.ne.s32.totalorder %s75, %s76
      %p85 = scmp.eq.s32.totalorder %s23, 0
      %p86 = por %p84, %p85
      %p87 = scmp.ne.s32.totalorder %s75, %s76
      %p88 = scmp.eq.s32.totalorder %s24, 1
      %p89 = por %p87, %p88
      %p91 = scmp.ne.s32.totalorder %s76, %s90
      %p92 = scmp.eq.s32.totalorder %s24, 0
      %p93 = por %p91, %p92
      %s95 = sadd.s32 %s94, 1
      %p98 = scmp.eq.s32.totalorder %s18, 1
      %p99 = scmp.ne.s32.totalorder %s94, %s96
      %p100 = scmp.eq.s32.totalorder %s18, 0
      %p101 = por %p99, %p100
      %p102 = scmp.ne.s32.totalorder %s94, %s96
      %p103 = scmp.eq.s32.totalorder %s23, 1
      %p104 = por %p102, %p103
      %p105 = scmp.ne.s32.totalorder %s96, %s97
      %p106 = scmp.eq.s32.totalorder %s23, 0
      %p107 = por %p105, %p106
      %p108 = scmp.ne.s32.totalorder %s96, %s97
      %p109 = scmp.eq.s32.totalorder %s24, 1
      %p110 = por %p108, %p109
      %p112 = scmp.ne.s32.totalorder %s97, %s111
      %p113 = scmp.eq.s32.totalorder %s24, 0
      %p114 = por %p112, %p113
      %s116 = sadd.s32 %s115, 1
      %p119 = scmp.eq.s32.totalorder %s18, 1
      %p120 = scmp.ne.s32.totalorder %s115, %s117
      %p121 = scmp.eq.s32.totalorder %s18, 0
      %p122 = por %p120, %p121
      %p123 = scmp.ne.s32.totalorder %s115, %s117
      %p124 = scmp.eq.s32.totalorder %s23, 1
      %p125 = por %p123, %p124
      %p126 = scmp.ne.s32.totalorder %s117, %s118
      %p127 = scmp.eq.s32.totalorder %s23, 0
      %p128 = por %p126, %p127
      %p129 = scmp.ne.s32.totalorder %s117, %s118
      %p130 = scmp.eq.s32.totalorder %s24, 1
      %p131 = por %p129, %p130
      %p133 = scmp.ne.s32.totalorder %s118, %s132
      %p134 = scmp.eq.s32.totalorder %s24, 0
      %p135 = por %p133, %p134
      %s137 = sadd.s32 %s136, 1
      %p140 = scmp.eq.s32.totalorder %s18, 1
      %p141 = scmp.ne.s32.totalorder %s136, %s138
      %p142 = scmp.eq.s32.totalorder %s18, 0
      %p143 = por %p141, %p142
      %p144 = scmp.ne.s32.totalorder %s136, %s138
      %p145 = scmp.eq.s32.totalorder %s23, 1
      %p146 = por %p144, %p145
      %p147 = scmp.ne.s32.totalorder %s138, %s139
      %p148 = scmp.eq.s32.totalorder %s23, 0
      %p149 = por %p147, %p148
      %p150 = scmp.ne.s32.totalorder %s138, %s139
      %p151 = scmp.eq.s32.totalorder %s24, 1
      %p152 = por %p150, %p151
      %p154 = scmp.ne.s32.totalorder %s139, %s153
      %p155 = scmp.eq.s32.totalorder %s24, 0
      %p156 = por %p154, %p155
      %s158 = sadd.s32 %s157, 1
      %p161 = scmp.eq.s32.totalorder %s18, 1
      %p162 = scmp.ne.s32.totalorder %s157, %s159
      %p163 = scmp.eq.s32.totalorder %s18, 0
      %p164 = por %p162, %p163
      %p165 = scmp.ne.s32.totalorder %s157, %s159
      %p166 = scmp.eq.s32.totalorder %s23, 1
      %p167 = por %p165, %p166
      %p168 = scmp.ne.s32.totalorder %s159, %s160
      %p169 = scmp.eq.s32.totalorder %s23, 0
      %p170 = por %p168, %p169
      %p171 = scmp.ne.s32.totalorder %s159, %s160
      %p172 = scmp.eq.s32.totalorder %s24, 1
      %p173 = por %p171, %p172
      %p175 = scmp.ne.s32.totalorder %s160, %s174
      %p176 = scmp.eq.s32.totalorder %s24, 0
      %p177 = por %p175, %p176
      %s178 = ssub.s32 %s18, %s25
      %p179 = scmp.eq.s32.totalorder %s178, 0
      %s181 = sadd.s32 %s180, 1
      %s182 = scalar_select %p179, %s180, %s181
      %p185 = pneg %p179
      %p186 = scmp.eq.s32.totalorder %s18, 1
      %p187 = por %p185, %p186
      %p188 = scmp.ne.s32.totalorder %s180, %s183
      %p189 = scmp.eq.s32.totalorder %s18, 0
      %p190 = por %p188, %p189
      %p191 = scmp.ne.s32.totalorder %s180, %s183
      %p192 = scmp.eq.s32.totalorder %s23, 1
      %p193 = por %p191, %p192
      %p194 = scmp.ne.s32.totalorder %s183, %s184
      %p195 = scmp.eq.s32.totalorder %s23, 0
      %p196 = por %p194, %p195
      %p197 = scmp.ne.s32.totalorder %s183, %s184
      %p198 = scmp.eq.s32.totalorder %s24, 1
      %p199 = por %p197, %p198
      %p201 = scmp.ne.s32.totalorder %s184, %s200
      %p202 = scmp.eq.s32.totalorder %s24, 0
      %p203 = por %p201, %p202
      %p204 = scmp.le.s32.totalorder 1, %s18
      %p205 = scmp.lt.s32.totalorder %s18, 3
      %p206 = pnand %p204, %p205
      %p207 = pneg %p206
      // Predicated region
      $region9: #{three_fc_layer_forward.1} parent=5 // pred_check
        _
      $region10: #{three_fc_layer_forward.1} parent=5 // pred_check_branch
        %209 = sbr.rel (%p206) target = $region12
      $region11: #{three_fc_layer_forward.1} parent=5 // pred_region
        %s210 = ssub.s32 %s18, 1
        // Predicated region
        $region13: #{three_fc_layer_forward.1} parent=11 // pred_check
          %p211 = pneg %p65
        $region14: #{three_fc_layer_forward.1} parent=11 // pred_check_branch
          %213 = sbr.rel (%p211) target = $region16
        $region15: #{three_fc_layer_forward.1} parent=11 // pred_region
          _
        $region16: #{three_fc_layer_forward.1} parent=11 // pred_fallthru
          _
        // Predicated region
        $region17: #{three_fc_layer_forward.1} parent=11 // pred_check
          %p214 = pneg %p86
        $region18: #{three_fc_layer_forward.1} parent=11 // pred_check_branch
          %216 = sbr.rel (%p214) target = $region20
        $region19: #{three_fc_layer_forward.1} parent=11 // pred_region
          _
        $region20: #{three_fc_layer_forward.1} parent=11 // pred_fallthru
          _
        // Predicated region
        $region21: #{three_fc_layer_forward.1} parent=11 // pred_check
          %p217 = pneg %p107
        $region22: #{three_fc_layer_forward.1} parent=11 // pred_check_branch
          %219 = sbr.rel (%p217) target = $region24
        $region23: #{three_fc_layer_forward.1} parent=11 // pred_region
          _
        $region24: #{three_fc_layer_forward.1} parent=11 // pred_fallthru
          _
        // Predicated region
        $region25: #{three_fc_layer_forward.1} parent=11 // pred_check
          %p220 = pneg %p128
        $region26: #{three_fc_layer_forward.1} parent=11 // pred_check_branch
          %222 = sbr.rel (%p220) target = $region28
        $region27: #{three_fc_layer_forward.1} parent=11 // pred_region
          _
        $region28: #{three_fc_layer_forward.1} parent=11 // pred_fallthru
          _
        // Predicated region
        $region29: #{three_fc_layer_forward.1} parent=11 // pred_check
          %p223 = pneg %p149
        $region30: #{three_fc_layer_forward.1} parent=11 // pred_check_branch
          %225 = sbr.rel (%p223) target = $region32
        $region31: #{three_fc_layer_forward.1} parent=11 // pred_region
          _
        $region32: #{three_fc_layer_forward.1} parent=11 // pred_fallthru
          _
        // Predicated region
        $region33: #{three_fc_layer_forward.1} parent=11 // pred_check
          %p226 = pneg %p170
        $region34: #{three_fc_layer_forward.1} parent=11 // pred_check_branch
          %228 = sbr.rel (%p226) target = $region36
        $region35: #{three_fc_layer_forward.1} parent=11 // pred_region
          _
        $region36: #{three_fc_layer_forward.1} parent=11 // pred_fallthru
          _
      $region12: #{three_fc_layer_forward.1} parent=5 // pred_fallthru
        _
      %p229 = scmp.lt.s32.totalorder %s18, 2
      // Predicated region
      $region37: #{three_fc_layer_forward.1} parent=5 // pred_check
        %p230 = pneg %p229
      $region38: #{three_fc_layer_forward.1} parent=5 // pred_check_branch
        %232 = sbr.rel (%p230) target = $region40
      $region39: #{three_fc_layer_forward.1} parent=5 // pred_region
        // Predicated region
        $region41: #{three_fc_layer_forward.1} parent=39 // pred_check
          %p233 = pneg %p38
        $region42: #{three_fc_layer_forward.1} parent=39 // pred_check_branch
          %235 = sbr.rel (%p233) target = $region44
        $region43: #{three_fc_layer_forward.1} parent=39 // pred_region
          %p236 = scmp.lt.s32.totalorder %s18, 1
          %s237 = scalar_select %p236, %s18, 1
          %s238 = smul.addr %s237, 192
          %s239 = smul.addr %s238, 8
          %s240 = scalar_lea.vmem %s0, %s239
        $region44: #{three_fc_layer_forward.1} parent=39 // pred_fallthru
          _
      $region40: #{three_fc_layer_forward.1} parent=5 // pred_fallthru
        _
      %p241 = scmp.le.s32.totalorder 1, %s18
      %p242 = scmp.lt.s32.totalorder %s18, 3
      %p243 = pnand %p241, %p242
      %p244 = pneg %p243
      // Predicated region
      $region45: #{three_fc_layer_forward.1} parent=5 // pred_check
        _
      $region46: #{three_fc_layer_forward.1} parent=5 // pred_check_branch
        %246 = sbr.rel (%p243) target = $region48
      $region47: #{three_fc_layer_forward.1} parent=5 // pred_region
        %s247 = ssub.s32 %s18, 1
        %p248 = scmp.lt.s32.totalorder %s23, 1
        %s249 = scalar_select %p248, %s23, 1
        %s250 = smul.addr %s249, 192
        %s251 = smul.addr %s250, 8
        %s252 = scalar_lea.vmem %s0, %s251
        %p253 = pneg %p44
        %p254 = pneg %p41
        %p255 = pneg %p65
        %p256 = pneg %p62
        %p257 = pneg %p86
        %p258 = pneg %p83
        %p259 = pneg %p107
        %p260 = pneg %p104
        %p261 = pneg %p128
        %p262 = pneg %p125
        %p263 = pneg %p149
        %p264 = pneg %p146
        %p265 = pneg %p170
        %p266 = pneg %p167
        %p267 = pneg %p196
        %p268 = pneg %p193
        %s269 = sand.u32 %s183, 1
        %s270 = scalar_lea.sflag [#allocation4], %s269
        %s271 = sand.u32 %s183, 1
        %s272 = smul.addr %s271, 2
        %s273 = scalar_lea.vmem [#allocation3], %s272
        %p274 = scmp.lt.s32.totalorder %s23, 1
        %s275 = scalar_select %p274, %s23, 1
        %s276 = smul.addr %s275, 192
        %s277 = smul.addr %s276, 8
        %s278 = scalar_lea.vmem %s0, %s277
        %v280 = vld [vmem:[%s278] sm:$0xff]
        %v281 = vld [vmem:[%s278 + $0x8] sm:$0xff]
        %v282 = vld [vmem:[%s278 + $0x10] sm:$0xff]
        %v283 = vld [vmem:[%s278 + $0x18] sm:$0xff]
        %v284 = vld [vmem:[%s278 + $0x20] sm:$0xff]
        %v285 = vld [vmem:[%s278 + $0x28] sm:$0xff]
        %v286 = vld [vmem:[%s278 + $0x30] sm:$0xff]
        %v287 = vld [vmem:[%s278 + $0x38] sm:$0xff]
        %v288 = vld [vmem:[%s278 + $0x40] sm:$0xff]
        %v289 = vld [vmem:[%s278 + $0x48] sm:$0xff]
        %v290 = vld [vmem:[%s278 + $0x50] sm:$0xff]
        %v291 = vld [vmem:[%s278 + $0x58] sm:$0xff]
        %v292 = vld [vmem:[%s278 + $0x60] sm:$0xff]
        %v293 = vld [vmem:[%s278 + $0x68] sm:$0xff]
        %v294 = vld [vmem:[%s278 + $0x70] sm:$0xff]
        %v295 = vld [vmem:[%s278 + $0x78] sm:$0xff]
        %v296 = vld [vmem:[%s278 + $0x80] sm:$0xff]
        %v297 = vld [vmem:[%s278 + $0x88] sm:$0xff]
        %v298 = vld [vmem:[%s278 + $0x90] sm:$0xff]
        %v299 = vld [vmem:[%s278 + $0x98] sm:$0xff]
        %v300 = vld [vmem:[%s278 + $0xa0] sm:$0xff]
        %v301 = vld [vmem:[%s278 + $0xa8] sm:$0xff]
        %v302 = vld [vmem:[%s278 + $0xb0] sm:$0xff]
        %v303 = vld [vmem:[%s278 + $0xb8] sm:$0xff]
        %v304 = vld [vmem:[%s278 + $0xc0] sm:$0xff]
        %v305 = vld [vmem:[%s278 + $0xc8] sm:$0xff]
        %v306 = vld [vmem:[%s278 + $0xd0] sm:$0xff]
        %v307 = vld [vmem:[%s278 + $0xd8] sm:$0xff]
        %v308 = vld [vmem:[%s278 + $0xe0] sm:$0xff]
        %v309 = vld [vmem:[%s278 + $0xe8] sm:$0xff]
        %v310 = vld [vmem:[%s278 + $0xf0] sm:$0xff]
        %v311 = vld [vmem:[%s278 + $0xf8] sm:$0xff]
        %v312 = vld [vmem:[%s278 + $0x100] sm:$0xff]
        %v313 = vld [vmem:[%s278 + $0x108] sm:$0xff]
        %v314 = vld [vmem:[%s278 + $0x110] sm:$0xff]
        %v315 = vld [vmem:[%s278 + $0x118] sm:$0xff]
        %v316 = vld [vmem:[%s278 + $0x120] sm:$0xff]
        %v317 = vld [vmem:[%s278 + $0x128] sm:$0xff]
        %v318 = vld [vmem:[%s278 + $0x130] sm:$0xff]
        %v319 = vld [vmem:[%s278 + $0x138] sm:$0xff]
        %v320 = vld [vmem:[%s278 + $0x140] sm:$0xff]
        %v321 = vld [vmem:[%s278 + $0x148] sm:$0xff]
        %v322 = vld [vmem:[%s278 + $0x150] sm:$0xff]
        %v323 = vld [vmem:[%s278 + $0x158] sm:$0xff]
        %v324 = vld [vmem:[%s278 + $0x160] sm:$0xff]
        %v325 = vld [vmem:[%s278 + $0x168] sm:$0xff]
        %v326 = vld [vmem:[%s278 + $0x170] sm:$0xff]
        %v327 = vld [vmem:[%s278 + $0x178] sm:$0xff]
        %v328 = vld [vmem:[%s278 + $0x180] sm:$0xff]
        %v329 = vld [vmem:[%s278 + $0x188] sm:$0xff]
        %v330 = vld [vmem:[%s278 + $0x190] sm:$0xff]
        %v331 = vld [vmem:[%s278 + $0x198] sm:$0xff]
        %v332 = vld [vmem:[%s278 + $0x1a0] sm:$0xff]
        %v333 = vld [vmem:[%s278 + $0x1a8] sm:$0xff]
        %v334 = vld [vmem:[%s278 + $0x1b0] sm:$0xff]
        %v335 = vld [vmem:[%s278 + $0x1b8] sm:$0xff]
        %v336 = vld [vmem:[%s278 + $0x1c0] sm:$0xff]
        %v337 = vld [vmem:[%s278 + $0x1c8] sm:$0xff]
        %v338 = vld [vmem:[%s278 + $0x1d0] sm:$0xff]
        %v339 = vld [vmem:[%s278 + $0x1d8] sm:$0xff]
        %v340 = vld [vmem:[%s278 + $0x1e0] sm:$0xff]
        %v341 = vld [vmem:[%s278 + $0x1e8] sm:$0xff]
        %v342 = vld [vmem:[%s278 + $0x1f0] sm:$0xff]
        %v343 = vld [vmem:[%s278 + $0x1f8] sm:$0xff]
        %v344 = vld [vmem:[%s278 + $0x200] sm:$0xff]
        %v345 = vld [vmem:[%s278 + $0x208] sm:$0xff]
        %v346 = vld [vmem:[%s278 + $0x210] sm:$0xff]
        %v347 = vld [vmem:[%s278 + $0x218] sm:$0xff]
        %v348 = vld [vmem:[%s278 + $0x220] sm:$0xff]
        %v349 = vld [vmem:[%s278 + $0x228] sm:$0xff]
        %v350 = vld [vmem:[%s278 + $0x230] sm:$0xff]
        %v351 = vld [vmem:[%s278 + $0x238] sm:$0xff]
        %v352 = vld [vmem:[%s278 + $0x240] sm:$0xff]
        %v353 = vld [vmem:[%s278 + $0x248] sm:$0xff]
        %v354 = vld [vmem:[%s278 + $0x250] sm:$0xff]
        %v355 = vld [vmem:[%s278 + $0x258] sm:$0xff]
        %v356 = vld [vmem:[%s278 + $0x260] sm:$0xff]
        %v357 = vld [vmem:[%s278 + $0x268] sm:$0xff]
        %v358 = vld [vmem:[%s278 + $0x270] sm:$0xff]
        %v359 = vld [vmem:[%s278 + $0x278] sm:$0xff]
        %v360 = vld [vmem:[%s278 + $0x280] sm:$0xff]
        %v361 = vld [vmem:[%s278 + $0x288] sm:$0xff]
        %v362 = vld [vmem:[%s278 + $0x290] sm:$0xff]
        %v363 = vld [vmem:[%s278 + $0x298] sm:$0xff]
        %v364 = vld [vmem:[%s278 + $0x2a0] sm:$0xff]
        %v365 = vld [vmem:[%s278 + $0x2a8] sm:$0xff]
        %v366 = vld [vmem:[%s278 + $0x2b0] sm:$0xff]
        %v367 = vld [vmem:[%s278 + $0x2b8] sm:$0xff]
        %v368 = vld [vmem:[%s278 + $0x2c0] sm:$0xff]
        %v369 = vld [vmem:[%s278 + $0x2c8] sm:$0xff]
        %v370 = vld [vmem:[%s278 + $0x2d0] sm:$0xff]
        %v371 = vld [vmem:[%s278 + $0x2d8] sm:$0xff]
        %v372 = vld [vmem:[%s278 + $0x2e0] sm:$0xff]
        %v373 = vld [vmem:[%s278 + $0x2e8] sm:$0xff]
        %v374 = vld [vmem:[%s278 + $0x2f0] sm:$0xff]
        %v375 = vld [vmem:[%s278 + $0x2f8] sm:$0xff]
        %v376 = vld [vmem:[%s278 + $0x300] sm:$0xff]
        %v377 = vld [vmem:[%s278 + $0x308] sm:$0xff]
        %v378 = vld [vmem:[%s278 + $0x310] sm:$0xff]
        %v379 = vld [vmem:[%s278 + $0x318] sm:$0xff]
        %v380 = vld [vmem:[%s278 + $0x320] sm:$0xff]
        %v381 = vld [vmem:[%s278 + $0x328] sm:$0xff]
        %v382 = vld [vmem:[%s278 + $0x330] sm:$0xff]
        %v383 = vld [vmem:[%s278 + $0x338] sm:$0xff]
        %v384 = vld [vmem:[%s278 + $0x340] sm:$0xff]
        %v385 = vld [vmem:[%s278 + $0x348] sm:$0xff]
        %v386 = vld [vmem:[%s278 + $0x350] sm:$0xff]
        %v387 = vld [vmem:[%s278 + $0x358] sm:$0xff]
        %v388 = vld [vmem:[%s278 + $0x360] sm:$0xff]
        %v389 = vld [vmem:[%s278 + $0x368] sm:$0xff]
        %v390 = vld [vmem:[%s278 + $0x370] sm:$0xff]
        %v391 = vld [vmem:[%s278 + $0x378] sm:$0xff]
        %v392 = vld [vmem:[%s278 + $0x380] sm:$0xff]
        %v393 = vld [vmem:[%s278 + $0x388] sm:$0xff]
        %v394 = vld [vmem:[%s278 + $0x390] sm:$0xff]
        %v395 = vld [vmem:[%s278 + $0x398] sm:$0xff]
        %v396 = vld [vmem:[%s278 + $0x3a0] sm:$0xff]
        %v397 = vld [vmem:[%s278 + $0x3a8] sm:$0xff]
        %v398 = vld [vmem:[%s278 + $0x3b0] sm:$0xff]
        %v399 = vld [vmem:[%s278 + $0x3b8] sm:$0xff]
        %v400 = vld [vmem:[%s278 + $0x3c0] sm:$0xff]
        %v401 = vld [vmem:[%s278 + $0x3c8] sm:$0xff]
        %v402 = vld [vmem:[%s278 + $0x3d0] sm:$0xff]
        %v403 = vld [vmem:[%s278 + $0x3d8] sm:$0xff]
        %v404 = vld [vmem:[%s278 + $0x3e0] sm:$0xff]
        %v405 = vld [vmem:[%s278 + $0x3e8] sm:$0xff]
        %v406 = vld [vmem:[%s278 + $0x3f0] sm:$0xff]
        %v407 = vld [vmem:[%s278 + $0x3f8] sm:$0xff]
        %v408 = vld [vmem:[%s278 + $0x400] sm:$0xff]
        %v409 = vld [vmem:[%s278 + $0x408] sm:$0xff]
        %v410 = vld [vmem:[%s278 + $0x410] sm:$0xff]
        %v411 = vld [vmem:[%s278 + $0x418] sm:$0xff]
        %v412 = vld [vmem:[%s278 + $0x420] sm:$0xff]
        %v413 = vld [vmem:[%s278 + $0x428] sm:$0xff]
        %v414 = vld [vmem:[%s278 + $0x430] sm:$0xff]
        %v415 = vld [vmem:[%s278 + $0x438] sm:$0xff]
        %v416 = vld [vmem:[%s278 + $0x440] sm:$0xff]
        %v417 = vld [vmem:[%s278 + $0x448] sm:$0xff]
        %v418 = vld [vmem:[%s278 + $0x450] sm:$0xff]
        %v419 = vld [vmem:[%s278 + $0x458] sm:$0xff]
        %v420 = vld [vmem:[%s278 + $0x460] sm:$0xff]
        %v421 = vld [vmem:[%s278 + $0x468] sm:$0xff]
        %v422 = vld [vmem:[%s278 + $0x470] sm:$0xff]
        %v423 = vld [vmem:[%s278 + $0x478] sm:$0xff]
        %v424 = vld [vmem:[%s278 + $0x480] sm:$0xff]
        %v425 = vld [vmem:[%s278 + $0x488] sm:$0xff]
        %v426 = vld [vmem:[%s278 + $0x490] sm:$0xff]
        %v427 = vld [vmem:[%s278 + $0x498] sm:$0xff]
        %v428 = vld [vmem:[%s278 + $0x4a0] sm:$0xff]
        %v429 = vld [vmem:[%s278 + $0x4a8] sm:$0xff]
        %v430 = vld [vmem:[%s278 + $0x4b0] sm:$0xff]
        %v431 = vld [vmem:[%s278 + $0x4b8] sm:$0xff]
        %v432 = vld [vmem:[%s278 + $0x4c0] sm:$0xff]
        %v433 = vld [vmem:[%s278 + $0x4c8] sm:$0xff]
        %v434 = vld [vmem:[%s278 + $0x4d0] sm:$0xff]
        %v435 = vld [vmem:[%s278 + $0x4d8] sm:$0xff]
        %v436 = vld [vmem:[%s278 + $0x4e0] sm:$0xff]
        %v437 = vld [vmem:[%s278 + $0x4e8] sm:$0xff]
        %v438 = vld [vmem:[%s278 + $0x4f0] sm:$0xff]
        %v439 = vld [vmem:[%s278 + $0x4f8] sm:$0xff]
        %v440 = vld [vmem:[%s278 + $0x500] sm:$0xff]
        %v441 = vld [vmem:[%s278 + $0x508] sm:$0xff]
        %v442 = vld [vmem:[%s278 + $0x510] sm:$0xff]
        %v443 = vld [vmem:[%s278 + $0x518] sm:$0xff]
        %v444 = vld [vmem:[%s278 + $0x520] sm:$0xff]
        %v445 = vld [vmem:[%s278 + $0x528] sm:$0xff]
        %v446 = vld [vmem:[%s278 + $0x530] sm:$0xff]
        %v447 = vld [vmem:[%s278 + $0x538] sm:$0xff]
        %v448 = vld [vmem:[%s278 + $0x540] sm:$0xff]
        %v449 = vld [vmem:[%s278 + $0x548] sm:$0xff]
        %v450 = vld [vmem:[%s278 + $0x550] sm:$0xff]
        %v451 = vld [vmem:[%s278 + $0x558] sm:$0xff]
        %v452 = vld [vmem:[%s278 + $0x560] sm:$0xff]
        %v453 = vld [vmem:[%s278 + $0x568] sm:$0xff]
        %v454 = vld [vmem:[%s278 + $0x570] sm:$0xff]
        %v455 = vld [vmem:[%s278 + $0x578] sm:$0xff]
        %v456 = vld [vmem:[%s278 + $0x580] sm:$0xff]
        %v457 = vld [vmem:[%s278 + $0x588] sm:$0xff]
        %v458 = vld [vmem:[%s278 + $0x590] sm:$0xff]
        %v459 = vld [vmem:[%s278 + $0x598] sm:$0xff]
        %v460 = vld [vmem:[%s278 + $0x5a0] sm:$0xff]
        %v461 = vld [vmem:[%s278 + $0x5a8] sm:$0xff]
        %v462 = vld [vmem:[%s278 + $0x5b0] sm:$0xff]
        %v463 = vld [vmem:[%s278 + $0x5b8] sm:$0xff]
        %v464 = vld [vmem:[%s278 + $0x5c0] sm:$0xff]
        %v465 = vld [vmem:[%s278 + $0x5c8] sm:$0xff]
        %v466 = vld [vmem:[%s278 + $0x5d0] sm:$0xff]
        %v467 = vld [vmem:[%s278 + $0x5d8] sm:$0xff]
        %v468 = vld [vmem:[%s278 + $0x5e0] sm:$0xff]
        %v469 = vld [vmem:[%s278 + $0x5e8] sm:$0xff]
        %v470 = vld [vmem:[%s278 + $0x5f0] sm:$0xff]
        %v471 = vld [vmem:[%s278 + $0x5f8] sm:$0xff]
        %v472 = vpack.c.bf16 %v286, %v280
        %v473 = vpack.c.bf16 %v287, %v281
        %v474 = vpack.c.bf16 %v288, %v282
        %v475 = vpack.c.bf16 %v289, %v283
        %v476 = vpack.c.bf16 %v290, %v284
        %v477 = vpack.c.bf16 %v291, %v285
        %v478 = vpack.c.bf16 %v298, %v292
        %v479 = vpack.c.bf16 %v299, %v293
        %v480 = vpack.c.bf16 %v300, %v294
        %v481 = vpack.c.bf16 %v301, %v295
        %v482 = vpack.c.bf16 %v302, %v296
        %v483 = vpack.c.bf16 %v303, %v297
        %v484 = vpack.c.bf16 %v310, %v304
        %v485 = vpack.c.bf16 %v311, %v305
        %v486 = vpack.c.bf16 %v312, %v306
        %v487 = vpack.c.bf16 %v313, %v307
        %v488 = vpack.c.bf16 %v314, %v308
        %v489 = vpack.c.bf16 %v315, %v309
        %v490 = vpack.c.bf16 %v322, %v316
        %v491 = vpack.c.bf16 %v323, %v317
        %v492 = vpack.c.bf16 %v324, %v318
        %v493 = vpack.c.bf16 %v325, %v319
        %v494 = vpack.c.bf16 %v326, %v320
        %v495 = vpack.c.bf16 %v327, %v321
        %v496 = vpack.c.bf16 %v334, %v328
        %v497 = vpack.c.bf16 %v335, %v329
        %v498 = vpack.c.bf16 %v336, %v330
        %v499 = vpack.c.bf16 %v337, %v331
        %v500 = vpack.c.bf16 %v338, %v332
        %v501 = vpack.c.bf16 %v339, %v333
        %v502 = vpack.c.bf16 %v346, %v340
        %v503 = vpack.c.bf16 %v347, %v341
        %v504 = vpack.c.bf16 %v348, %v342
        %v505 = vpack.c.bf16 %v349, %v343
        %v506 = vpack.c.bf16 %v350, %v344
        %v507 = vpack.c.bf16 %v351, %v345
        %v508 = vpack.c.bf16 %v358, %v352
        %v509 = vpack.c.bf16 %v359, %v353
        %v510 = vpack.c.bf16 %v360, %v354
        %v511 = vpack.c.bf16 %v361, %v355
        %v512 = vpack.c.bf16 %v362, %v356
        %v513 = vpack.c.bf16 %v363, %v357
        %v514 = vpack.c.bf16 %v370, %v364
        %v515 = vpack.c.bf16 %v371, %v365
        %v516 = vpack.c.bf16 %v372, %v366
        %v517 = vpack.c.bf16 %v373, %v367
        %v518 = vpack.c.bf16 %v374, %v368
        %v519 = vpack.c.bf16 %v375, %v369
        %v520 = vpack.c.bf16 %v382, %v376
        %v521 = vpack.c.bf16 %v383, %v377
        %v522 = vpack.c.bf16 %v384, %v378
        %v523 = vpack.c.bf16 %v385, %v379
        %v524 = vpack.c.bf16 %v386, %v380
        %v525 = vpack.c.bf16 %v387, %v381
        %v526 = vpack.c.bf16 %v394, %v388
        %v527 = vpack.c.bf16 %v395, %v389
        %v528 = vpack.c.bf16 %v396, %v390
        %v529 = vpack.c.bf16 %v397, %v391
        %v530 = vpack.c.bf16 %v398, %v392
        %v531 = vpack.c.bf16 %v399, %v393
        %v532 = vpack.c.bf16 %v406, %v400
        %v533 = vpack.c.bf16 %v407, %v401
        %v534 = vpack.c.bf16 %v408, %v402
        %v535 = vpack.c.bf16 %v409, %v403
        %v536 = vpack.c.bf16 %v410, %v404
        %v537 = vpack.c.bf16 %v411, %v405
        %v538 = vpack.c.bf16 %v418, %v412
        %v539 = vpack.c.bf16 %v419, %v413
        %v540 = vpack.c.bf16 %v420, %v414
        %v541 = vpack.c.bf16 %v421, %v415
        %v542 = vpack.c.bf16 %v422, %v416
        %v543 = vpack.c.bf16 %v423, %v417
        %v544 = vpack.c.bf16 %v430, %v424
        %v545 = vpack.c.bf16 %v431, %v425
        %v546 = vpack.c.bf16 %v432, %v426
        %v547 = vpack.c.bf16 %v433, %v427
        %v548 = vpack.c.bf16 %v434, %v428
        %v549 = vpack.c.bf16 %v435, %v429
        %v550 = vpack.c.bf16 %v442, %v436
        %v551 = vpack.c.bf16 %v443, %v437
        %v552 = vpack.c.bf16 %v444, %v438
        %v553 = vpack.c.bf16 %v445, %v439
        %v554 = vpack.c.bf16 %v446, %v440
        %v555 = vpack.c.bf16 %v447, %v441
        %v556 = vpack.c.bf16 %v454, %v448
        %v557 = vpack.c.bf16 %v455, %v449
        %v558 = vpack.c.bf16 %v456, %v450
        %v559 = vpack.c.bf16 %v457, %v451
        %v560 = vpack.c.bf16 %v458, %v452
        %v561 = vpack.c.bf16 %v459, %v453
        %v562 = vpack.c.bf16 %v466, %v460
        %v563 = vpack.c.bf16 %v467, %v461
        %v564 = vpack.c.bf16 %v468, %v462
        %v565 = vpack.c.bf16 %v469, %v463
        %v566 = vpack.c.bf16 %v470, %v464
        %v567 = vpack.c.bf16 %v471, %v465
        %v568 = vld [vmem:[%s1] sm:$0xff]
        %v569 = vld [vmem:[%s1 + $0x8] sm:$0xff]
        %v570 = vld [vmem:[%s1 + $0x10] sm:$0xff]
        %v571 = vld [vmem:[%s1 + $0x18] sm:$0xff]
        %v572 = vld [vmem:[%s1 + $0x20] sm:$0xff]
        %v573 = vld [vmem:[%s1 + $0x28] sm:$0xff]
        %v574 = vld [vmem:[%s1 + $0x30] sm:$0xff]
        %v575 = vld [vmem:[%s1 + $0x38] sm:$0xff]
        %v576 = vld [vmem:[%s1 + $0x40] sm:$0xff]
        %v577 = vld [vmem:[%s1 + $0x48] sm:$0xff]
        %v578 = vld [vmem:[%s1 + $0x50] sm:$0xff]
        %v579 = vld [vmem:[%s1 + $0x58] sm:$0xff]
        %v580 = vld [vmem:[%s1 + $0x60] sm:$0xff]
        %v581 = vld [vmem:[%s1 + $0x68] sm:$0xff]
        %v582 = vld [vmem:[%s1 + $0x70] sm:$0xff]
        %v583 = vld [vmem:[%s1 + $0x78] sm:$0xff]
        %v584 = vld [vmem:[%s1 + $0x80] sm:$0xff]
        %v585 = vld [vmem:[%s1 + $0x88] sm:$0xff]
        %v586 = vld [vmem:[%s1 + $0x90] sm:$0xff]
        %v587 = vld [vmem:[%s1 + $0x98] sm:$0xff]
        %v588 = vld [vmem:[%s1 + $0xa0] sm:$0xff]
        %v589 = vld [vmem:[%s1 + $0xa8] sm:$0xff]
        %v590 = vld [vmem:[%s1 + $0xb0] sm:$0xff]
        %v591 = vld [vmem:[%s1 + $0xb8] sm:$0xff]
        %v592 = vld [vmem:[%s1 + $0xc0] sm:$0xff]
        %v593 = vld [vmem:[%s1 + $0xc8] sm:$0xff]
        %v594 = vld [vmem:[%s1 + $0xd0] sm:$0xff]
        %v595 = vld [vmem:[%s1 + $0xd8] sm:$0xff]
        %v596 = vld [vmem:[%s1 + $0xe0] sm:$0xff]
        %v597 = vld [vmem:[%s1 + $0xe8] sm:$0xff]
        %v598 = vld [vmem:[%s1 + $0xf0] sm:$0xff]
        %v599 = vld [vmem:[%s1 + $0xf8] sm:$0xff]
        %v600 = vld [vmem:[%s1 + $0x100] sm:$0xff]
        %v601 = vld [vmem:[%s1 + $0x108] sm:$0xff]
        %v602 = vld [vmem:[%s1 + $0x110] sm:$0xff]
        %v603 = vld [vmem:[%s1 + $0x118] sm:$0xff]
        %v604 = vld [vmem:[%s1 + $0x120] sm:$0xff]
        %v605 = vld [vmem:[%s1 + $0x128] sm:$0xff]
        %v606 = vld [vmem:[%s1 + $0x130] sm:$0xff]
        %v607 = vld [vmem:[%s1 + $0x138] sm:$0xff]
        %v608 = vld [vmem:[%s1 + $0x140] sm:$0xff]
        %v609 = vld [vmem:[%s1 + $0x148] sm:$0xff]
        %v610 = vld [vmem:[%s1 + $0x150] sm:$0xff]
        %v611 = vld [vmem:[%s1 + $0x158] sm:$0xff]
        %v612 = vld [vmem:[%s1 + $0x160] sm:$0xff]
        %v613 = vld [vmem:[%s1 + $0x168] sm:$0xff]
        %v614 = vld [vmem:[%s1 + $0x170] sm:$0xff]
        %v615 = vld [vmem:[%s1 + $0x178] sm:$0xff]
        %v616 = vld [vmem:[%s2] sm:$0xff]
        %v617 = vld [vmem:[%s2 + $0x8] sm:$0xff]
        %v618 = vld [vmem:[%s2 + $0x10] sm:$0xff]
        %v619 = vld [vmem:[%s2 + $0x18] sm:$0xff]
        %v620 = vld [vmem:[%s2 + $0x20] sm:$0xff]
        %v621 = vld [vmem:[%s2 + $0x28] sm:$0xff]
        %v622 = vld [vmem:[%s2 + $0x30] sm:$0xff]
        %v623 = vld [vmem:[%s2 + $0x38] sm:$0xff]
        %v624 = vld [vmem:[%s2 + $0x40] sm:$0xff]
        %v625 = vld [vmem:[%s2 + $0x48] sm:$0xff]
        %v626 = vld [vmem:[%s2 + $0x50] sm:$0xff]
        %v627 = vld [vmem:[%s2 + $0x58] sm:$0xff]
        %v628 = vld [vmem:[%s2 + $0x60] sm:$0xff]
        %v629 = vld [vmem:[%s2 + $0x68] sm:$0xff]
        %v630 = vld [vmem:[%s2 + $0x70] sm:$0xff]
        %v631 = vld [vmem:[%s2 + $0x78] sm:$0xff]
        %633 = vset.pattern.permute.xlu0 0
        %634 = vperm.xlu0 %633, %v616
        %v635 = vpop.permute.xlu0 %634
        %638 = vset.pattern.permute.xlu0 0
        %639 = vperm.xlu0 %638, %v617
        %v640 = vpop.permute.xlu0 %639
        %643 = vset.pattern.permute.xlu0 0
        %644 = vperm.xlu0 %643, %v618
        %v645 = vpop.permute.xlu0 %644
        %648 = vset.pattern.permute.xlu0 0
        %649 = vperm.xlu0 %648, %v619
        %v650 = vpop.permute.xlu0 %649
        %653 = vset.pattern.permute.xlu0 0
        %654 = vperm.xlu0 %653, %v620
        %v655 = vpop.permute.xlu0 %654
        %658 = vset.pattern.permute.xlu0 0
        %659 = vperm.xlu0 %658, %v621
        %v660 = vpop.permute.xlu0 %659
        %663 = vset.pattern.permute.xlu0 0
        %664 = vperm.xlu0 %663, %v622
        %v665 = vpop.permute.xlu0 %664
        %668 = vset.pattern.permute.xlu0 0
        %669 = vperm.xlu0 %668, %v623
        %v670 = vpop.permute.xlu0 %669
        %673 = vset.pattern.permute.xlu0 0
        %674 = vperm.xlu0 %673, %v624
        %v675 = vpop.permute.xlu0 %674
        %678 = vset.pattern.permute.xlu0 0
        %679 = vperm.xlu0 %678, %v625
        %v680 = vpop.permute.xlu0 %679
        %683 = vset.pattern.permute.xlu0 0
        %684 = vperm.xlu0 %683, %v626
        %v685 = vpop.permute.xlu0 %684
        %688 = vset.pattern.permute.xlu0 0
        %689 = vperm.xlu0 %688, %v627
        %v690 = vpop.permute.xlu0 %689
        %693 = vset.pattern.permute.xlu0 0
        %694 = vperm.xlu0 %693, %v628
        %v695 = vpop.permute.xlu0 %694
        %698 = vset.pattern.permute.xlu0 0
        %699 = vperm.xlu0 %698, %v629
        %v700 = vpop.permute.xlu0 %699
        %703 = vset.pattern.permute.xlu0 0
        %704 = vperm.xlu0 %703, %v630
        %v705 = vpop.permute.xlu0 %704
        %708 = vset.pattern.permute.xlu0 0
        %709 = vperm.xlu0 %708, %v631
        %v710 = vpop.permute.xlu0 %709
        %v760 = vunpack.c.l.b16 %v568
        %v761 = vunpack.c.h.b16 %v568
        %v762 = vunpack.c.l.b16 %v569
        %v763 = vunpack.c.h.b16 %v569
        %v764 = vunpack.c.l.b16 %v570
        %v765 = vunpack.c.h.b16 %v570
        %v766 = vunpack.c.l.b16 %v571
        %v767 = vunpack.c.h.b16 %v571
        %v768 = vunpack.c.l.b16 %v572
        %v769 = vunpack.c.h.b16 %v572
        %v770 = vunpack.c.l.b16 %v573
        %v771 = vunpack.c.h.b16 %v573
        %v772 = vunpack.c.l.b16 %v574
        %v773 = vunpack.c.h.b16 %v574
        %v774 = vunpack.c.l.b16 %v575
        %v775 = vunpack.c.h.b16 %v575
        %v776 = vunpack.c.l.b16 %v576
        %v777 = vunpack.c.h.b16 %v576
        %v778 = vunpack.c.l.b16 %v577
        %v779 = vunpack.c.h.b16 %v577
        %v780 = vunpack.c.l.b16 %v578
        %v781 = vunpack.c.h.b16 %v578
        %v782 = vunpack.c.l.b16 %v579
        %v783 = vunpack.c.h.b16 %v579
        %v784 = vunpack.c.l.b16 %v580
        %v785 = vunpack.c.h.b16 %v580
        %v786 = vunpack.c.l.b16 %v581
        %v787 = vunpack.c.h.b16 %v581
        %v788 = vunpack.c.l.b16 %v582
        %v789 = vunpack.c.h.b16 %v582
        %v790 = vunpack.c.l.b16 %v583
        %v791 = vunpack.c.h.b16 %v583
        %v792 = vunpack.c.l.b16 %v584
        %v793 = vunpack.c.h.b16 %v584
        %v794 = vunpack.c.l.b16 %v585
        %v795 = vunpack.c.h.b16 %v585
        %v796 = vunpack.c.l.b16 %v586
        %v797 = vunpack.c.h.b16 %v586
        %v798 = vunpack.c.l.b16 %v587
        %v799 = vunpack.c.h.b16 %v587
        %v800 = vunpack.c.l.b16 %v588
        %v801 = vunpack.c.h.b16 %v588
        %v802 = vunpack.c.l.b16 %v589
        %v803 = vunpack.c.h.b16 %v589
        %v804 = vunpack.c.l.b16 %v590
        %v805 = vunpack.c.h.b16 %v590
        %v806 = vunpack.c.l.b16 %v591
        %v807 = vunpack.c.h.b16 %v591
        %v808 = vunpack.c.l.b16 %v592
        %v809 = vunpack.c.h.b16 %v592
        %v810 = vunpack.c.l.b16 %v593
        %v811 = vunpack.c.h.b16 %v593
        %v812 = vunpack.c.l.b16 %v594
        %v813 = vunpack.c.h.b16 %v594
        %v814 = vunpack.c.l.b16 %v595
        %v815 = vunpack.c.h.b16 %v595
        %v816 = vunpack.c.l.b16 %v596
        %v817 = vunpack.c.h.b16 %v596
        %v818 = vunpack.c.l.b16 %v597
        %v819 = vunpack.c.h.b16 %v597
        %v820 = vunpack.c.l.b16 %v598
        %v821 = vunpack.c.h.b16 %v598
        %v822 = vunpack.c.l.b16 %v599
        %v823 = vunpack.c.h.b16 %v599
        %v824 = vunpack.c.l.b16 %v600
        %v825 = vunpack.c.h.b16 %v600
        %v826 = vunpack.c.l.b16 %v601
        %v827 = vunpack.c.h.b16 %v601
        %v828 = vunpack.c.l.b16 %v602
        %v829 = vunpack.c.h.b16 %v602
        %v830 = vunpack.c.l.b16 %v603
        %v831 = vunpack.c.h.b16 %v603
        %v832 = vunpack.c.l.b16 %v604
        %v833 = vunpack.c.h.b16 %v604
        %v834 = vunpack.c.l.b16 %v605
        %v835 = vunpack.c.h.b16 %v605
        %v836 = vunpack.c.l.b16 %v606
        %v837 = vunpack.c.h.b16 %v606
        %v838 = vunpack.c.l.b16 %v607
        %v839 = vunpack.c.h.b16 %v607
        %v840 = vunpack.c.l.b16 %v608
        %v841 = vunpack.c.h.b16 %v608
        %v842 = vunpack.c.l.b16 %v609
        %v843 = vunpack.c.h.b16 %v609
        %v844 = vunpack.c.l.b16 %v610
        %v845 = vunpack.c.h.b16 %v610
        %v846 = vunpack.c.l.b16 %v611
        %v847 = vunpack.c.h.b16 %v611
        %v848 = vunpack.c.l.b16 %v612
        %v849 = vunpack.c.h.b16 %v612
        %v850 = vunpack.c.l.b16 %v613
        %v851 = vunpack.c.h.b16 %v613
        %v852 = vunpack.c.l.b16 %v614
        %v853 = vunpack.c.h.b16 %v614
        %v854 = vunpack.c.l.b16 %v615
        %v855 = vunpack.c.h.b16 %v615
        %v856 = vpack.c.b16 %v766, %v760
        %v857 = vpack.c.b16 %v767, %v761
        %v858 = vpack.c.b16 %v768, %v762
        %v859 = vpack.c.b16 %v769, %v763
        %v860 = vpack.c.b16 %v770, %v764
        %v861 = vpack.c.b16 %v771, %v765
        %v862 = vpack.c.b16 %v778, %v772
        %v863 = vpack.c.b16 %v779, %v773
        %v864 = vpack.c.b16 %v780, %v774
        %v865 = vpack.c.b16 %v781, %v775
        %v866 = vpack.c.b16 %v782, %v776
        %v867 = vpack.c.b16 %v783, %v777
        %v868 = vpack.c.b16 %v790, %v784
        %v869 = vpack.c.b16 %v791, %v785
        %v870 = vpack.c.b16 %v792, %v786
        %v871 = vpack.c.b16 %v793, %v787
        %v872 = vpack.c.b16 %v794, %v788
        %v873 = vpack.c.b16 %v795, %v789
        %v874 = vpack.c.b16 %v802, %v796
        %v875 = vpack.c.b16 %v803, %v797
        %v876 = vpack.c.b16 %v804, %v798
        %v877 = vpack.c.b16 %v805, %v799
        %v878 = vpack.c.b16 %v806, %v800
        %v879 = vpack.c.b16 %v807, %v801
        %v880 = vpack.c.b16 %v814, %v808
        %v881 = vpack.c.b16 %v815, %v809
        %v882 = vpack.c.b16 %v816, %v810
        %v883 = vpack.c.b16 %v817, %v811
        %v884 = vpack.c.b16 %v818, %v812
        %v885 = vpack.c.b16 %v819, %v813
        %v886 = vpack.c.b16 %v826, %v820
        %v887 = vpack.c.b16 %v827, %v821
        %v888 = vpack.c.b16 %v828, %v822
        %v889 = vpack.c.b16 %v829, %v823
        %v890 = vpack.c.b16 %v830, %v824
        %v891 = vpack.c.b16 %v831, %v825
        %v892 = vpack.c.b16 %v838, %v832
        %v893 = vpack.c.b16 %v839, %v833
        %v894 = vpack.c.b16 %v840, %v834
        %v895 = vpack.c.b16 %v841, %v835
        %v896 = vpack.c.b16 %v842, %v836
        %v897 = vpack.c.b16 %v843, %v837
        %v898 = vpack.c.b16 %v850, %v844
        %v899 = vpack.c.b16 %v851, %v845
        %v900 = vpack.c.b16 %v852, %v846
        %v901 = vpack.c.b16 %v853, %v847
        %v902 = vpack.c.b16 %v854, %v848
        %v903 = vpack.c.b16 %v855, %v849
        %vm944 = vcmask 687104
        %v946 = vsel %vm944, %v861, 0
        %v949 = vsel %vm944, %v867, 0
        %v952 = vsel %vm944, %v873, 0
        %v955 = vsel %vm944, %v879, 0
        %v958 = vsel %vm944, %v885, 0
        %v961 = vsel %vm944, %v891, 0
        %v964 = vsel %vm944, %v897, 0
        %v967 = vsel %vm944, %v903, 0
        %v970 = vsel %vm944, %v477, 0
        %v973 = vsel %vm944, %v483, 0
        %v976 = vsel %vm944, %v489, 0
        %v979 = vsel %vm944, %v495, 0
        %v982 = vsel %vm944, %v501, 0
        %v985 = vsel %vm944, %v507, 0
        %v988 = vsel %vm944, %v513, 0
        %v991 = vsel %vm944, %v519, 0
        %v994 = vsel %vm944, %v525, 0
        %v997 = vsel %vm944, %v531, 0
        %v1000 = vsel %vm944, %v537, 0
        %v1003 = vsel %vm944, %v543, 0
        %v1006 = vsel %vm944, %v549, 0
        %v1009 = vsel %vm944, %v555, 0
        %v1012 = vsel %vm944, %v561, 0
        %v1015 = vsel %vm944, %v567, 0
        %1017 = vmatprep.subr.bf16.mxu0 %v473
        %1018 = vmatpush1.bf16.xpose.msra.mxu0 %v472
        %1019 = vmatprep.subr.bf16.mxu0 %v479
        %1020 = vmatpush1.bf16.xpose.msra.mxu0 %v478
        %1021 = vmatprep.subr.bf16.mxu0 %v485
        %1022 = vmatpush1.bf16.xpose.msra.mxu0 %v484
        %1023 = vmatprep.subr.bf16.mxu0 %v491
        %1024 = vmatpush1.bf16.xpose.msra.mxu0 %v490
        %1025 = vmatprep.subr.bf16.mxu0 %v497
        %1026 = vmatpush1.bf16.xpose.msra.mxu0 %v496
        %1027 = vmatprep.subr.bf16.mxu0 %v503
        %1028 = vmatpush1.bf16.xpose.msra.mxu0 %v502
        %1029 = vmatprep.subr.bf16.mxu0 %v509
        %1030 = vmatpush1.bf16.xpose.msra.mxu0 %v508
        %1031 = vmatprep.subr.bf16.mxu0 %v515
        %1032 = vmatpush1.bf16.xpose.msra.mxu0 %v514
        %1033 = vmatprep.subr.bf16.mxu0 %v521
        %1034 = vmatpush1.bf16.xpose.msra.mxu0 %v520
        %1035 = vmatprep.subr.bf16.mxu0 %v527
        %1036 = vmatpush1.bf16.xpose.msra.mxu0 %v526
        %1037 = vmatprep.subr.bf16.mxu0 %v533
        %1038 = vmatpush1.bf16.xpose.msra.mxu0 %v532
        %1039 = vmatprep.subr.bf16.mxu0 %v539
        %1040 = vmatpush1.bf16.xpose.msra.mxu0 %v538
        %1041 = vmatprep.subr.bf16.mxu0 %v545
        %1042 = vmatpush1.bf16.xpose.msra.mxu0 %v544
        %1043 = vmatprep.subr.bf16.mxu0 %v551
        %1044 = vmatpush1.bf16.xpose.msra.mxu0 %v550
        %1045 = vmatprep.subr.bf16.mxu0 %v557
        %1046 = vmatpush1.bf16.xpose.msra.mxu0 %v556
        %1047 = vmatprep.subr.bf16.mxu0 %v563
        %1048 = vmatpush1.bf16.xpose.msra.mxu0 %v562
        %1049 = vmatprep.mubr.bf16.mxu0 %v857
        %1050 = vmatmul.mubr.bf16.gmra.mrb[0].mxu0 %v856
        %v1051 = vpop.f32.mrb[0].mxu0
        %v1052 = vadd.f32 %v635, %v1051
        %v1053 = vpop.f32.mrb[0].mxu0
        %v1054 = vadd.f32 %v635, %v1053
        %v1055 = vpop.f32.mrb[0].mxu0
        %v1056 = vadd.f32 %v640, %v1055
        %v1057 = vpop.f32.mrb[0].mxu0
        %v1058 = vadd.f32 %v640, %v1057
        %1059 = vmatprep.mubr.bf16.mxu0 %v863
        %1060 = vmatmul.mubr.bf16.gmra.mrb[0].mxu0 %v862
        %v1061 = vpop.f32.mrb[0].mxu0
        %v1062 = vadd.f32 %v645, %v1061
        %v1063 = vpop.f32.mrb[0].mxu0
        %v1064 = vadd.f32 %v645, %v1063
        %v1065 = vpop.f32.mrb[0].mxu0
        %v1066 = vadd.f32 %v650, %v1065
        %v1067 = vpop.f32.mrb[0].mxu0
        %v1068 = vadd.f32 %v650, %v1067
        %1069 = vmatprep.mubr.bf16.mxu0 %v869
        %1070 = vmatmul.mubr.bf16.gmra.mrb[0].mxu0 %v868
        %v1071 = vpop.f32.mrb[0].mxu0
        %v1072 = vadd.f32 %v655, %v1071
        %v1073 = vpop.f32.mrb[0].mxu0
        %v1074 = vadd.f32 %v655, %v1073
        %v1075 = vpop.f32.mrb[0].mxu0
        %v1076 = vadd.f32 %v660, %v1075
        %v1077 = vpop.f32.mrb[0].mxu0
        %v1078 = vadd.f32 %v660, %v1077
        %1079 = vmatprep.mubr.bf16.mxu0 %v875
        %1080 = vmatmul.mubr.bf16.gmra.mrb[0].mxu0 %v874
        %v1081 = vpop.f32.mrb[0].mxu0
        %v1082 = vadd.f32 %v665, %v1081
        %v1083 = vpop.f32.mrb[0].mxu0
        %v1084 = vadd.f32 %v665, %v1083
        %v1085 = vpop.f32.mrb[0].mxu0
        %v1086 = vadd.f32 %v670, %v1085
        %v1087 = vpop.f32.mrb[0].mxu0
        %v1088 = vadd.f32 %v670, %v1087
        %1089 = vmatprep.mubr.bf16.mxu0 %v881
        %1090 = vmatmul.mubr.bf16.gmra.mrb[0].mxu0 %v880
        %v1091 = vpop.f32.mrb[0].mxu0
        %v1092 = vadd.f32 %v675, %v1091
        %v1093 = vpop.f32.mrb[0].mxu0
        %v1094 = vadd.f32 %v675, %v1093
        %v1095 = vpop.f32.mrb[0].mxu0
        %v1096 = vadd.f32 %v680, %v1095
        %v1097 = vpop.f32.mrb[0].mxu0
        %v1098 = vadd.f32 %v680, %v1097
        %1099 = vmatprep.mubr.bf16.mxu0 %v887
        %1100 = vmatmul.mubr.bf16.gmra.mrb[0].mxu0 %v886
        %v1101 = vpop.f32.mrb[0].mxu0
        %v1102 = vadd.f32 %v685, %v1101
        %v1103 = vpop.f32.mrb[0].mxu0
        %v1104 = vadd.f32 %v685, %v1103
        %v1105 = vpop.f32.mrb[0].mxu0
        %v1106 = vadd.f32 %v690, %v1105
        %v1107 = vpop.f32.mrb[0].mxu0
        %v1108 = vadd.f32 %v690, %v1107
        %1109 = vmatprep.mubr.bf16.mxu0 %v893
        %1110 = vmatmul.mubr.bf16.gmra.mrb[0].mxu0 %v892
        %v1111 = vpop.f32.mrb[0].mxu0
        %v1112 = vadd.f32 %v695, %v1111
        %v1113 = vpop.f32.mrb[0].mxu0
        %v1114 = vadd.f32 %v695, %v1113
        %v1115 = vpop.f32.mrb[0].mxu0
        %v1116 = vadd.f32 %v700, %v1115
        %v1117 = vpop.f32.mrb[0].mxu0
        %v1118 = vadd.f32 %v700, %v1117
        %1119 = vmatprep.mubr.bf16.mxu0 %v899
        %1120 = vmatmul.mubr.bf16.gmra.mrb[0].mxu0 %v898
        %v1121 = vpop.f32.mrb[0].mxu0
        %v1122 = vadd.f32 %v705, %v1121
        %v1123 = vpop.f32.mrb[0].mxu0
        %v1124 = vadd.f32 %v705, %v1123
        %v1125 = vpop.f32.mrb[0].mxu0
        %v1126 = vadd.f32 %v710, %v1125
        %v1127 = vpop.f32.mrb[0].mxu0
        %v1128 = vadd.f32 %v710, %v1127
        %1129 = vdwg.mxu0
        %1130 = vmatprep.subr.bf16.mxu0 %v475
        %1131 = vmatpush1.bf16.xpose.msra.mxu0 %v474
        %1132 = vmatprep.subr.bf16.mxu0 %v481
        %1133 = vmatpush1.bf16.xpose.msra.mxu0 %v480
        %1134 = vmatprep.subr.bf16.mxu0 %v487
        %1135 = vmatpush1.bf16.xpose.msra.mxu0 %v486
        %1136 = vmatprep.subr.bf16.mxu0 %v493
        %1137 = vmatpush1.bf16.xpose.msra.mxu0 %v492
        %1138 = vmatprep.subr.bf16.mxu0 %v499
        %1139 = vmatpush1.bf16.xpose.msra.mxu0 %v498
        %1140 = vmatprep.subr.bf16.mxu0 %v505
        %1141 = vmatpush1.bf16.xpose.msra.mxu0 %v504
        %1142 = vmatprep.subr.bf16.mxu0 %v511
        %1143 = vmatpush1.bf16.xpose.msra.mxu0 %v510
        %1144 = vmatprep.subr.bf16.mxu0 %v517
        %1145 = vmatpush1.bf16.xpose.msra.mxu0 %v516
        %1146 = vmatprep.subr.bf16.mxu0 %v523
        %1147 = vmatpush1.bf16.xpose.msra.mxu0 %v522
        %1148 = vmatprep.subr.bf16.mxu0 %v529
        %1149 = vmatpush1.bf16.xpose.msra.mxu0 %v528
        %1150 = vmatprep.subr.bf16.mxu0 %v535
        %1151 = vmatpush1.bf16.xpose.msra.mxu0 %v534
        %1152 = vmatprep.subr.bf16.mxu0 %v541
        %1153 = vmatpush1.bf16.xpose.msra.mxu0 %v540
        %1154 = vmatprep.subr.bf16.mxu0 %v547
        %1155 = vmatpush1.bf16.xpose.msra.mxu0 %v546
        %1156 = vmatprep.subr.bf16.mxu0 %v553
        %1157 = vmatpush1.bf16.xpose.msra.mxu0 %v552
        %1158 = vmatprep.subr.bf16.mxu0 %v559
        %1159 = vmatpush1.bf16.xpose.msra.mxu0 %v558
        %1160 = vmatprep.subr.bf16.mxu0 %v565
        %1161 = vmatpush1.bf16.xpose.msra.mxu0 %v564
        %1162 = vmatprep.mubr.bf16.mxu0 %v859
        %1163 = vmatmul.mubr.bf16.gmra.mrb[0].mxu0 %v858
        %v1164 = vpop.f32.mrb[0].mxu0
        %v1165 = vadd.f32 %v1052, %v1164
        %v1166 = vpop.f32.mrb[0].mxu0
        %v1167 = vadd.f32 %v1054, %v1166
        %v1168 = vpop.f32.mrb[0].mxu0
        %v1169 = vadd.f32 %v1056, %v1168
        %v1170 = vpop.f32.mrb[0].mxu0
        %v1171 = vadd.f32 %v1058, %v1170
        %1172 = vmatprep.mubr.bf16.mxu0 %v865
        %1173 = vmatmul.mubr.bf16.gmra.mrb[0].mxu0 %v864
        %v1174 = vpop.f32.mrb[0].mxu0
        %v1175 = vadd.f32 %v1062, %v1174
        %v1176 = vpop.f32.mrb[0].mxu0
        %v1177 = vadd.f32 %v1064, %v1176
        %v1178 = vpop.f32.mrb[0].mxu0
        %v1179 = vadd.f32 %v1066, %v1178
        %v1180 = vpop.f32.mrb[0].mxu0
        %v1181 = vadd.f32 %v1068, %v1180
        %1182 = vmatprep.mubr.bf16.mxu0 %v871
        %1183 = vmatmul.mubr.bf16.gmra.mrb[0].mxu0 %v870
        %v1184 = vpop.f32.mrb[0].mxu0
        %v1185 = vadd.f32 %v1072, %v1184
        %v1186 = vpop.f32.mrb[0].mxu0
        %v1187 = vadd.f32 %v1074, %v1186
        %v1188 = vpop.f32.mrb[0].mxu0
        %v1189 = vadd.f32 %v1076, %v1188
        %v1190 = vpop.f32.mrb[0].mxu0
        %v1191 = vadd.f32 %v1078, %v1190
        %1192 = vmatprep.mubr.bf16.mxu0 %v877
        %1193 = vmatmul.mubr.bf16.gmra.mrb[0].mxu0 %v876
        %v1194 = vpop.f32.mrb[0].mxu0
        %v1195 = vadd.f32 %v1082, %v1194
        %v1196 = vpop.f32.mrb[0].mxu0
        %v1197 = vadd.f32 %v1084, %v1196
        %v1198 = vpop.f32.mrb[0].mxu0
        %v1199 = vadd.f32 %v1086, %v1198
        %v1200 = vpop.f32.mrb[0].mxu0
        %v1201 = vadd.f32 %v1088, %v1200
        %1202 = vmatprep.mubr.bf16.mxu0 %v883
        %1203 = vmatmul.mubr.bf16.gmra.mrb[0].mxu0 %v882
        %v1204 = vpop.f32.mrb[0].mxu0
        %v1205 = vadd.f32 %v1092, %v1204
        %v1206 = vpop.f32.mrb[0].mxu0
        %v1207 = vadd.f32 %v1094, %v1206
        %v1208 = vpop.f32.mrb[0].mxu0
        %v1209 = vadd.f32 %v1096, %v1208
        %v1210 = vpop.f32.mrb[0].mxu0
        %v1211 = vadd.f32 %v1098, %v1210
        %1212 = vmatprep.mubr.bf16.mxu0 %v889
        %1213 = vmatmul.mubr.bf16.gmra.mrb[0].mxu0 %v888
        %v1214 = vpop.f32.mrb[0].mxu0
        %v1215 = vadd.f32 %v1102, %v1214
        %v1216 = vpop.f32.mrb[0].mxu0
        %v1217 = vadd.f32 %v1104, %v1216
        %v1218 = vpop.f32.mrb[0].mxu0
        %v1219 = vadd.f32 %v1106, %v1218
        %v1220 = vpop.f32.mrb[0].mxu0
        %v1221 = vadd.f32 %v1108, %v1220
        %1222 = vmatprep.mubr.bf16.mxu0 %v895
        %1223 = vmatmul.mubr.bf16.gmra.mrb[0].mxu0 %v894
        %v1224 = vpop.f32.mrb[0].mxu0
        %v1225 = vadd.f32 %v1112, %v1224
        %v1226 = vpop.f32.mrb[0].mxu0
        %v1227 = vadd.f32 %v1114, %v1226
        %v1228 = vpop.f32.mrb[0].mxu0
        %v1229 = vadd.f32 %v1116, %v1228
        %v1230 = vpop.f32.mrb[0].mxu0
        %v1231 = vadd.f32 %v1118, %v1230
        %1232 = vmatprep.mubr.bf16.mxu0 %v901
        %1233 = vmatmul.mubr.bf16.gmra.mrb[0].mxu0 %v900
        %v1234 = vpop.f32.mrb[0].mxu0
        %v1235 = vadd.f32 %v1122, %v1234
        %v1236 = vpop.f32.mrb[0].mxu0
        %v1237 = vadd.f32 %v1124, %v1236
        %v1238 = vpop.f32.mrb[0].mxu0
        %v1239 = vadd.f32 %v1126, %v1238
        %v1240 = vpop.f32.mrb[0].mxu0
        %v1241 = vadd.f32 %v1128, %v1240
        %1242 = vdwg.mxu0
        %1243 = vmatprep.subr.bf16.mxu0 %v970
        %1244 = vmatpush1.bf16.xpose.msra.mxu0 %v476
        %1245 = vmatprep.subr.bf16.mxu0 %v973
        %1246 = vmatpush1.bf16.xpose.msra.mxu0 %v482
        %1247 = vmatprep.subr.bf16.mxu0 %v976
        %1248 = vmatpush1.bf16.xpose.msra.mxu0 %v488
        %1249 = vmatprep.subr.bf16.mxu0 %v979
        %1250 = vmatpush1.bf16.xpose.msra.mxu0 %v494
        %1251 = vmatprep.subr.bf16.mxu0 %v982
        %1252 = vmatpush1.bf16.xpose.msra.mxu0 %v500
        %1253 = vmatprep.subr.bf16.mxu0 %v985
        %1254 = vmatpush1.bf16.xpose.msra.mxu0 %v506
        %1255 = vmatprep.subr.bf16.mxu0 %v988
        %1256 = vmatpush1.bf16.xpose.msra.mxu0 %v512
        %1257 = vmatprep.subr.bf16.mxu0 %v991
        %1258 = vmatpush1.bf16.xpose.msra.mxu0 %v518
        %1259 = vmatprep.subr.bf16.mxu0 %v994
        %1260 = vmatpush1.bf16.xpose.msra.mxu0 %v524
        %1261 = vmatprep.subr.bf16.mxu0 %v997
        %1262 = vmatpush1.bf16.xpose.msra.mxu0 %v530
        %1263 = vmatprep.subr.bf16.mxu0 %v1000
        %1264 = vmatpush1.bf16.xpose.msra.mxu0 %v536
        %1265 = vmatprep.subr.bf16.mxu0 %v1003
        %1266 = vmatpush1.bf16.xpose.msra.mxu0 %v542
        %1267 = vmatprep.subr.bf16.mxu0 %v1006
        %1268 = vmatpush1.bf16.xpose.msra.mxu0 %v548
        %1269 = vmatprep.subr.bf16.mxu0 %v1009
        %1270 = vmatpush1.bf16.xpose.msra.mxu0 %v554
        %1271 = vmatprep.subr.bf16.mxu0 %v1012
        %1272 = vmatpush1.bf16.xpose.msra.mxu0 %v560
        %1273 = vmatprep.subr.bf16.mxu0 %v1015
        %1274 = vmatpush1.bf16.xpose.msra.mxu0 %v566
        %1275 = vmatprep.mubr.bf16.mxu0 %v946
        %1276 = vmatmul.mubr.bf16.gmra.mrb[0].mxu0 %v860
        %v1277 = vpop.f32.mrb[0].mxu0
        %v1278 = vadd.f32 %v1165, %v1277
        %v1279 = vpop.f32.mrb[0].mxu0
        %v1280 = vadd.f32 %v1167, %v1279
        %v1281 = vpop.f32.mrb[0].mxu0
        %v1282 = vadd.f32 %v1169, %v1281
        %v1283 = vpop.f32.mrb[0].mxu0
        %v1284 = vadd.f32 %v1171, %v1283
        %1285 = vmatprep.mubr.bf16.mxu0 %v949
        %1286 = vmatmul.mubr.bf16.gmra.mrb[0].mxu0 %v866
        %v1287 = vpop.f32.mrb[0].mxu0
        %v1288 = vadd.f32 %v1175, %v1287
        %v1289 = vpop.f32.mrb[0].mxu0
        %v1290 = vadd.f32 %v1177, %v1289
        %v1291 = vpop.f32.mrb[0].mxu0
        %v1292 = vadd.f32 %v1179, %v1291
        %v1293 = vpop.f32.mrb[0].mxu0
        %v1294 = vadd.f32 %v1181, %v1293
        %1295 = vmatprep.mubr.bf16.mxu0 %v952
        %1296 = vmatmul.mubr.bf16.gmra.mrb[0].mxu0 %v872
        %v1297 = vpop.f32.mrb[0].mxu0
        %v1298 = vadd.f32 %v1185, %v1297
        %v1299 = vpop.f32.mrb[0].mxu0
        %v1300 = vadd.f32 %v1187, %v1299
        %v1301 = vpop.f32.mrb[0].mxu0
        %v1302 = vadd.f32 %v1189, %v1301
        %v1303 = vpop.f32.mrb[0].mxu0
        %v1304 = vadd.f32 %v1191, %v1303
        %1305 = vmatprep.mubr.bf16.mxu0 %v955
        %1306 = vmatmul.mubr.bf16.gmra.mrb[0].mxu0 %v878
        %v1307 = vpop.f32.mrb[0].mxu0
        %v1308 = vadd.f32 %v1195, %v1307
        %v1309 = vpop.f32.mrb[0].mxu0
        %v1310 = vadd.f32 %v1197, %v1309
        %v1311 = vpop.f32.mrb[0].mxu0
        %v1312 = vadd.f32 %v1199, %v1311
        %v1313 = vpop.f32.mrb[0].mxu0
        %v1314 = vadd.f32 %v1201, %v1313
        %1315 = vmatprep.mubr.bf16.mxu0 %v958
        %1316 = vmatmul.mubr.bf16.gmra.mrb[0].mxu0 %v884
        %v1317 = vpop.f32.mrb[0].mxu0
        %v1318 = vadd.f32 %v1205, %v1317
        %v1319 = vpop.f32.mrb[0].mxu0
        %v1320 = vadd.f32 %v1207, %v1319
        %v1321 = vpop.f32.mrb[0].mxu0
        %v1322 = vadd.f32 %v1209, %v1321
        %v1323 = vpop.f32.mrb[0].mxu0
        %v1324 = vadd.f32 %v1211, %v1323
        %1325 = vmatprep.mubr.bf16.mxu0 %v961
        %1326 = vmatmul.mubr.bf16.gmra.mrb[0].mxu0 %v890
        %v1327 = vpop.f32.mrb[0].mxu0
        %v1328 = vadd.f32 %v1215, %v1327
        %v1329 = vpop.f32.mrb[0].mxu0
        %v1330 = vadd.f32 %v1217, %v1329
        %v1331 = vpop.f32.mrb[0].mxu0
        %v1332 = vadd.f32 %v1219, %v1331
        %v1333 = vpop.f32.mrb[0].mxu0
        %v1334 = vadd.f32 %v1221, %v1333
        %1335 = vmatprep.mubr.bf16.mxu0 %v964
        %1336 = vmatmul.mubr.bf16.gmra.mrb[0].mxu0 %v896
        %v1337 = vpop.f32.mrb[0].mxu0
        %v1338 = vadd.f32 %v1225, %v1337
        %v1339 = vpop.f32.mrb[0].mxu0
        %v1340 = vadd.f32 %v1227, %v1339
        %v1341 = vpop.f32.mrb[0].mxu0
        %v1342 = vadd.f32 %v1229, %v1341
        %v1343 = vpop.f32.mrb[0].mxu0
        %v1344 = vadd.f32 %v1231, %v1343
        %1345 = vmatprep.mubr.bf16.mxu0 %v967
        %1346 = vmatmul.mubr.bf16.gmra.mrb[0].mxu0 %v902
        %v1347 = vpop.f32.mrb[0].mxu0
        %v1348 = vadd.f32 %v1235, %v1347
        %v1349 = vpop.f32.mrb[0].mxu0
        %v1350 = vadd.f32 %v1237, %v1349
        %v1351 = vpop.f32.mrb[0].mxu0
        %v1352 = vadd.f32 %v1239, %v1351
        %v1353 = vpop.f32.mrb[0].mxu0
        %v1354 = vadd.f32 %v1241, %v1353
        %1355 = vdwg.mxu0
        %vm1356 = vcmp.ge.f32.partialorder %v1278, 0.0
        %vm1357 = vcmp.ge.f32.partialorder %v1280, 0.0
        %vm1358 = vcmp.ge.f32.partialorder %v1282, 0.0
        %vm1359 = vcmp.ge.f32.partialorder %v1284, 0.0
        %vm1360 = vcmp.ge.f32.partialorder %v1288, 0.0
        %vm1361 = vcmp.ge.f32.partialorder %v1290, 0.0
        %vm1362 = vcmp.ge.f32.partialorder %v1292, 0.0
        %vm1363 = vcmp.ge.f32.partialorder %v1294, 0.0
        %vm1364 = vcmp.ge.f32.partialorder %v1298, 0.0
        %vm1365 = vcmp.ge.f32.partialorder %v1300, 0.0
        %vm1366 = vcmp.ge.f32.partialorder %v1302, 0.0
        %vm1367 = vcmp.ge.f32.partialorder %v1304, 0.0
        %vm1368 = vcmp.ge.f32.partialorder %v1308, 0.0
        %vm1369 = vcmp.ge.f32.partialorder %v1310, 0.0
        %vm1370 = vcmp.ge.f32.partialorder %v1312, 0.0
        %vm1371 = vcmp.ge.f32.partialorder %v1314, 0.0
        %vm1372 = vcmp.ge.f32.partialorder %v1318, 0.0
        %vm1373 = vcmp.ge.f32.partialorder %v1320, 0.0
        %vm1374 = vcmp.ge.f32.partialorder %v1322, 0.0
        %vm1375 = vcmp.ge.f32.partialorder %v1324, 0.0
        %vm1376 = vcmp.ge.f32.partialorder %v1328, 0.0
        %vm1377 = vcmp.ge.f32.partialorder %v1330, 0.0
        %vm1378 = vcmp.ge.f32.partialorder %v1332, 0.0
        %vm1379 = vcmp.ge.f32.partialorder %v1334, 0.0
        %vm1380 = vcmp.ge.f32.partialorder %v1338, 0.0
        %vm1381 = vcmp.ge.f32.partialorder %v1340, 0.0
        %vm1382 = vcmp.ge.f32.partialorder %v1342, 0.0
        %vm1383 = vcmp.ge.f32.partialorder %v1344, 0.0
        %vm1384 = vcmp.ge.f32.partialorder %v1348, 0.0
        %vm1385 = vcmp.ge.f32.partialorder %v1350, 0.0
        %vm1386 = vcmp.ge.f32.partialorder %v1352, 0.0
        %vm1387 = vcmp.ge.f32.partialorder %v1354, 0.0
        %v1388 = vmul.f32 %v1278, 0.1
        %v1389 = vmul.f32 %v1280, 0.1
        %v1390 = vmul.f32 %v1282, 0.1
        %v1391 = vmul.f32 %v1284, 0.1
        %v1392 = vmul.f32 %v1288, 0.1
        %v1393 = vmul.f32 %v1290, 0.1
        %v1394 = vmul.f32 %v1292, 0.1
        %v1395 = vmul.f32 %v1294, 0.1
        %v1396 = vmul.f32 %v1298, 0.1
        %v1397 = vmul.f32 %v1300, 0.1
        %v1398 = vmul.f32 %v1302, 0.1
        %v1399 = vmul.f32 %v1304, 0.1
        %v1400 = vmul.f32 %v1308, 0.1
        %v1401 = vmul.f32 %v1310, 0.1
        %v1402 = vmul.f32 %v1312, 0.1
        %v1403 = vmul.f32 %v1314, 0.1
        %v1404 = vmul.f32 %v1318, 0.1
        %v1405 = vmul.f32 %v1320, 0.1
        %v1406 = vmul.f32 %v1322, 0.1
        %v1407 = vmul.f32 %v1324, 0.1
        %v1408 = vmul.f32 %v1328, 0.1
        %v1409 = vmul.f32 %v1330, 0.1
        %v1410 = vmul.f32 %v1332, 0.1
        %v1411 = vmul.f32 %v1334, 0.1
        %v1412 = vmul.f32 %v1338, 0.1
        %v1413 = vmul.f32 %v1340, 0.1
        %v1414 = vmul.f32 %v1342, 0.1
        %v1415 = vmul.f32 %v1344, 0.1
        %v1416 = vmul.f32 %v1348, 0.1
        %v1417 = vmul.f32 %v1350, 0.1
        %v1418 = vmul.f32 %v1352, 0.1
        %v1419 = vmul.f32 %v1354, 0.1
        %v1420 = vsel %vm1356, %v1278, %v1388
        %v1421 = vsel %vm1357, %v1280, %v1389
        %v1422 = vsel %vm1358, %v1282, %v1390
        %v1423 = vsel %vm1359, %v1284, %v1391
        %v1424 = vsel %vm1360, %v1288, %v1392
        %v1425 = vsel %vm1361, %v1290, %v1393
        %v1426 = vsel %vm1362, %v1292, %v1394
        %v1427 = vsel %vm1363, %v1294, %v1395
        %v1428 = vsel %vm1364, %v1298, %v1396
        %v1429 = vsel %vm1365, %v1300, %v1397
        %v1430 = vsel %vm1366, %v1302, %v1398
        %v1431 = vsel %vm1367, %v1304, %v1399
        %v1432 = vsel %vm1368, %v1308, %v1400
        %v1433 = vsel %vm1369, %v1310, %v1401
        %v1434 = vsel %vm1370, %v1312, %v1402
        %v1435 = vsel %vm1371, %v1314, %v1403
        %v1436 = vsel %vm1372, %v1318, %v1404
        %v1437 = vsel %vm1373, %v1320, %v1405
        %v1438 = vsel %vm1374, %v1322, %v1406
        %v1439 = vsel %vm1375, %v1324, %v1407
        %v1440 = vsel %vm1376, %v1328, %v1408
        %v1441 = vsel %vm1377, %v1330, %v1409
        %v1442 = vsel %vm1378, %v1332, %v1410
        %v1443 = vsel %vm1379, %v1334, %v1411
        %v1444 = vsel %vm1380, %v1338, %v1412
        %v1445 = vsel %vm1381, %v1340, %v1413
        %v1446 = vsel %vm1382, %v1342, %v1414
        %v1447 = vsel %vm1383, %v1344, %v1415
        %v1448 = vsel %vm1384, %v1348, %v1416
        %v1449 = vsel %vm1385, %v1350, %v1417
        %v1450 = vsel %vm1386, %v1352, %v1418
        %v1451 = vsel %vm1387, %v1354, %v1419
        %v1452 = vld [vmem:[%s3] sm:$0xf]
        %v1453 = vld [vmem:[%s3 + $0x4] sm:$0xf]
        %v1454 = vld [vmem:[%s3 + $0x8] sm:$0xf]
        %v1455 = vld [vmem:[%s3 + $0xc] sm:$0xf]
        %v1456 = vld [vmem:[%s3 + $0x10] sm:$0xf]
        %v1457 = vld [vmem:[%s3 + $0x14] sm:$0xf]
        %v1458 = vld [vmem:[%s3 + $0x18] sm:$0xf]
        %v1459 = vld [vmem:[%s3 + $0x1c] sm:$0xf]
        %v1460 = vpack.c.bf16 %v1422, %v1420
        %v1461 = vpack.c.bf16 %v1423, %v1421
        %v1462 = vpack.c.bf16 %v1426, %v1424
        %v1463 = vpack.c.bf16 %v1427, %v1425
        %v1464 = vpack.c.bf16 %v1430, %v1428
        %v1465 = vpack.c.bf16 %v1431, %v1429
        %v1466 = vpack.c.bf16 %v1434, %v1432
        %v1467 = vpack.c.bf16 %v1435, %v1433
        %v1468 = vpack.c.bf16 %v1438, %v1436
        %v1469 = vpack.c.bf16 %v1439, %v1437
        %v1470 = vpack.c.bf16 %v1442, %v1440
        %v1471 = vpack.c.bf16 %v1443, %v1441
        %v1472 = vpack.c.bf16 %v1446, %v1444
        %v1473 = vpack.c.bf16 %v1447, %v1445
        %v1474 = vpack.c.bf16 %v1450, %v1448
        %v1475 = vpack.c.bf16 %v1451, %v1449
        %v1476 = vld [vmem:[%s4] sm:$0xff]
        %v1477 = vld [vmem:[%s4 + $0x8] sm:$0xff]
        %v1478 = vld [vmem:[%s4 + $0x10] sm:$0xff]
        %v1479 = vld [vmem:[%s4 + $0x18] sm:$0xff]
        %v1480 = vld [vmem:[%s4 + $0x20] sm:$0xff]
        %v1481 = vld [vmem:[%s4 + $0x28] sm:$0xff]
        %v1482 = vld [vmem:[%s4 + $0x30] sm:$0xff]
        %v1483 = vld [vmem:[%s4 + $0x38] sm:$0xff]
        %1485 = vset.pattern.permute.xlu0 0
        %1486 = vperm.xlu0 %1485, %v1476
        %v1487 = vpop.permute.xlu0 %1486
        %1490 = vset.pattern.permute.xlu0 0
        %1491 = vperm.xlu0 %1490, %v1477
        %v1492 = vpop.permute.xlu0 %1491
        %1495 = vset.pattern.permute.xlu0 0
        %1496 = vperm.xlu0 %1495, %v1478
        %v1497 = vpop.permute.xlu0 %1496
        %1500 = vset.pattern.permute.xlu0 0
        %1501 = vperm.xlu0 %1500, %v1479
        %v1502 = vpop.permute.xlu0 %1501
        %1505 = vset.pattern.permute.xlu0 0
        %1506 = vperm.xlu0 %1505, %v1480
        %v1507 = vpop.permute.xlu0 %1506
        %1510 = vset.pattern.permute.xlu0 0
        %1511 = vperm.xlu0 %1510, %v1481
        %v1512 = vpop.permute.xlu0 %1511
        %1515 = vset.pattern.permute.xlu0 0
        %1516 = vperm.xlu0 %1515, %v1482
        %v1517 = vpop.permute.xlu0 %1516
        %1520 = vset.pattern.permute.xlu0 0
        %1521 = vperm.xlu0 %1520, %v1483
        %v1522 = vpop.permute.xlu0 %1521
        %v1532 = vunpack.c.l.b16 %v1452
        %v1533 = vunpack.c.l.b16 %v1453
        %v1534 = vunpack.c.l.b16 %v1454
        %v1535 = vunpack.c.l.b16 %v1455
        %v1536 = vunpack.c.l.b16 %v1456
        %v1537 = vunpack.c.l.b16 %v1457
        %v1538 = vunpack.c.l.b16 %v1458
        %v1539 = vunpack.c.l.b16 %v1459
        %v1540 = vpack.c.b16 %v1533, %v1532
        %v1541 = vpack.c.b16 %v1535, %v1534
        %v1542 = vpack.c.b16 %v1537, %v1536
        %v1543 = vpack.c.b16 %v1539, %v1538
        %1548 = vmatprep.subr.bf16.mxu0 %v1461
        %1549 = vmatpush1.bf16.msra.mxu0 %v1460
        %1550 = vmatprep.subr.bf16.mxu0 %v1463
        %1551 = vmatpush1.bf16.msra.mxu0 %v1462
        %1552 = vmatprep.subr.bf16.mxu0 %v1465
        %1553 = vmatpush1.bf16.msra.mxu0 %v1464
        %1554 = vmatprep.subr.bf16.mxu0 %v1467
        %1555 = vmatpush1.bf16.msra.mxu0 %v1466
        %1556 = vmatprep.subr.bf16.mxu0 %v1469
        %1557 = vmatpush1.bf16.msra.mxu0 %v1468
        %1558 = vmatprep.subr.bf16.mxu0 %v1471
        %1559 = vmatpush1.bf16.msra.mxu0 %v1470
        %1560 = vmatprep.subr.bf16.mxu0 %v1473
        %1561 = vmatpush1.bf16.msra.mxu0 %v1472
        %1562 = vmatprep.subr.bf16.mxu0 %v1475
        %1563 = vmatpush1.bf16.msra.mxu0 %v1474
        %1564 = vmatprep.subr.bf16.mxu0 0
        %1565 = vmatpush1.bf16.msra.mxu0 0
        %1566 = vmatprep.subr.bf16.mxu0 0
        %1567 = vmatpush1.bf16.msra.mxu0 0
        %1568 = vmatprep.subr.bf16.mxu0 0
        %1569 = vmatpush1.bf16.msra.mxu0 0
        %1570 = vmatprep.subr.bf16.mxu0 0
        %1571 = vmatpush1.bf16.msra.mxu0 0
        %1572 = vmatprep.subr.bf16.mxu0 0
        %1573 = vmatpush1.bf16.msra.mxu0 0
        %1574 = vmatprep.subr.bf16.mxu0 0
        %1575 = vmatpush1.bf16.msra.mxu0 0
        %1576 = vmatprep.subr.bf16.mxu0 0
        %1577 = vmatpush1.bf16.msra.mxu0 0
        %1578 = vmatprep.subr.bf16.mxu0 0
        %1579 = vmatpush1.bf16.msra.mxu0 0
        %1580 = vmatprep.mubr.bf16.mxu0 0
        %1581 = vmatmul.mubr.bf16.gmra.mrb[0].mxu0 %v1540
        %v1582 = vpop.f32.mrb[0].mxu0
        %v1583 = vadd.f32 %v1487, %v1582
        %v1584 = vpop.f32.mrb[0].mxu0
        %v1585 = vadd.f32 %v1487, %v1584
        %v1586 = vpop.f32.mrb[0].mxu0
        %v1587 = vadd.f32 %v1492, %v1586
        %v1588 = vpop.f32.mrb[0].mxu0
        %v1589 = vadd.f32 %v1492, %v1588
        %1590 = vmatprep.mubr.bf16.mxu0 0
        %1591 = vmatmul.mubr.bf16.gmra.mrb[0].mxu0 %v1541
        %v1592 = vpop.f32.mrb[0].mxu0
        %v1593 = vadd.f32 %v1497, %v1592
        %v1594 = vpop.f32.mrb[0].mxu0
        %v1595 = vadd.f32 %v1497, %v1594
        %v1596 = vpop.f32.mrb[0].mxu0
        %v1597 = vadd.f32 %v1502, %v1596
        %v1598 = vpop.f32.mrb[0].mxu0
        %v1599 = vadd.f32 %v1502, %v1598
        %1600 = vmatprep.mubr.bf16.mxu0 0
        %1601 = vmatmul.mubr.bf16.gmra.mrb[0].mxu0 %v1542
        %v1602 = vpop.f32.mrb[0].mxu0
        %v1603 = vadd.f32 %v1507, %v1602
        %v1604 = vpop.f32.mrb[0].mxu0
        %v1605 = vadd.f32 %v1507, %v1604
        %v1606 = vpop.f32.mrb[0].mxu0
        %v1607 = vadd.f32 %v1512, %v1606
        %v1608 = vpop.f32.mrb[0].mxu0
        %v1609 = vadd.f32 %v1512, %v1608
        %1610 = vmatprep.mubr.bf16.mxu0 0
        %1611 = vmatmul.mubr.bf16.gmra.mrb[0].mxu0 %v1543
        %v1612 = vpop.f32.mrb[0].mxu0
        %v1613 = vadd.f32 %v1517, %v1612
        %v1614 = vpop.f32.mrb[0].mxu0
        %v1615 = vadd.f32 %v1517, %v1614
        %v1616 = vpop.f32.mrb[0].mxu0
        %v1617 = vadd.f32 %v1522, %v1616
        %v1618 = vpop.f32.mrb[0].mxu0
        %v1619 = vadd.f32 %v1522, %v1618
        %1620 = vdwg.mxu0
        %vm1621 = vcmp.ge.f32.partialorder %v1583, 0.0
        %vm1622 = vcmp.ge.f32.partialorder %v1585, 0.0
        %vm1623 = vcmp.ge.f32.partialorder %v1587, 0.0
        %vm1624 = vcmp.ge.f32.partialorder %v1589, 0.0
        %vm1625 = vcmp.ge.f32.partialorder %v1593, 0.0
        %vm1626 = vcmp.ge.f32.partialorder %v1595, 0.0
        %vm1627 = vcmp.ge.f32.partialorder %v1597, 0.0
        %vm1628 = vcmp.ge.f32.partialorder %v1599, 0.0
        %vm1629 = vcmp.ge.f32.partialorder %v1603, 0.0
        %vm1630 = vcmp.ge.f32.partialorder %v1605, 0.0
        %vm1631 = vcmp.ge.f32.partialorder %v1607, 0.0
        %vm1632 = vcmp.ge.f32.partialorder %v1609, 0.0
        %vm1633 = vcmp.ge.f32.partialorder %v1613, 0.0
        %vm1634 = vcmp.ge.f32.partialorder %v1615, 0.0
        %vm1635 = vcmp.ge.f32.partialorder %v1617, 0.0
        %vm1636 = vcmp.ge.f32.partialorder %v1619, 0.0
        %v1637 = vmul.f32 %v1583, 0.1
        %v1638 = vmul.f32 %v1585, 0.1
        %v1639 = vmul.f32 %v1587, 0.1
        %v1640 = vmul.f32 %v1589, 0.1
        %v1641 = vmul.f32 %v1593, 0.1
        %v1642 = vmul.f32 %v1595, 0.1
        %v1643 = vmul.f32 %v1597, 0.1
        %v1644 = vmul.f32 %v1599, 0.1
        %v1645 = vmul.f32 %v1603, 0.1
        %v1646 = vmul.f32 %v1605, 0.1
        %v1647 = vmul.f32 %v1607, 0.1
        %v1648 = vmul.f32 %v1609, 0.1
        %v1649 = vmul.f32 %v1613, 0.1
        %v1650 = vmul.f32 %v1615, 0.1
        %v1651 = vmul.f32 %v1617, 0.1
        %v1652 = vmul.f32 %v1619, 0.1
        %v1653 = vsel %vm1621, %v1583, %v1637
        %v1654 = vsel %vm1622, %v1585, %v1638
        %v1655 = vsel %vm1623, %v1587, %v1639
        %v1656 = vsel %vm1624, %v1589, %v1640
        %v1657 = vsel %vm1625, %v1593, %v1641
        %v1658 = vsel %vm1626, %v1595, %v1642
        %v1659 = vsel %vm1627, %v1597, %v1643
        %v1660 = vsel %vm1628, %v1599, %v1644
        %v1661 = vsel %vm1629, %v1603, %v1645
        %v1662 = vsel %vm1630, %v1605, %v1646
        %v1663 = vsel %vm1631, %v1607, %v1647
        %v1664 = vsel %vm1632, %v1609, %v1648
        %v1665 = vsel %vm1633, %v1613, %v1649
        %v1666 = vsel %vm1634, %v1615, %v1650
        %v1667 = vsel %vm1635, %v1617, %v1651
        %v1668 = vsel %vm1636, %v1619, %v1652
        %v1669 = vld [vmem:[%s5] sm:$0xff]
        %v1670 = vld [vmem:[%s5 + $0x8] sm:$0xff]
        %v1671 = vld [vmem:[%s5 + $0x10] sm:$0xff]
        %v1672 = vld [vmem:[%s5 + $0x18] sm:$0xff]
        %v1673 = vld [vmem:[%s5 + $0x20] sm:$0xff]
        %v1674 = vld [vmem:[%s5 + $0x28] sm:$0xff]
        %v1675 = vld [vmem:[%s5 + $0x30] sm:$0xff]
        %v1676 = vld [vmem:[%s5 + $0x38] sm:$0xff]
        %1678 = vset.pattern.permute.xlu0 0
        %1679 = vperm.xlu0 %1678, %v1669
        %v1680 = vpop.permute.xlu0 %1679
        %1683 = vset.pattern.permute.xlu0 0
        %1684 = vperm.xlu0 %1683, %v1670
        %v1685 = vpop.permute.xlu0 %1684
        %1688 = vset.pattern.permute.xlu0 0
        %1689 = vperm.xlu0 %1688, %v1671
        %v1690 = vpop.permute.xlu0 %1689
        %1693 = vset.pattern.permute.xlu0 0
        %1694 = vperm.xlu0 %1693, %v1672
        %v1695 = vpop.permute.xlu0 %1694
        %1698 = vset.pattern.permute.xlu0 0
        %1699 = vperm.xlu0 %1698, %v1673
        %v1700 = vpop.permute.xlu0 %1699
        %1703 = vset.pattern.permute.xlu0 0
        %1704 = vperm.xlu0 %1703, %v1674
        %v1705 = vpop.permute.xlu0 %1704
        %1708 = vset.pattern.permute.xlu0 0
        %1709 = vperm.xlu0 %1708, %v1675
        %v1710 = vpop.permute.xlu0 %1709
        %1713 = vset.pattern.permute.xlu0 0
        %1714 = vperm.xlu0 %1713, %v1676
        %v1715 = vpop.permute.xlu0 %1714
        %v1717 = vmul.f32 %v1653, %v1680
        %v1718 = vmul.f32 %v1654, %v1680
        %v1719 = vmul.f32 %v1655, %v1685
        %v1720 = vmul.f32 %v1656, %v1685
        %v1721 = vmul.f32 %v1657, %v1690
        %v1722 = vmul.f32 %v1658, %v1690
        %v1723 = vmul.f32 %v1659, %v1695
        %v1724 = vmul.f32 %v1660, %v1695
        %v1725 = vmul.f32 %v1661, %v1700
        %v1726 = vmul.f32 %v1662, %v1700
        %v1727 = vmul.f32 %v1663, %v1705
        %v1728 = vmul.f32 %v1664, %v1705
        %v1729 = vmul.f32 %v1665, %v1710
        %v1730 = vmul.f32 %v1666, %v1710
        %v1731 = vmul.f32 %v1667, %v1715
        %v1732 = vmul.f32 %v1668, %v1715
        %v1733 = vadd.f32 %v1717, %v1719
        %v1734 = vadd.f32 %v1733, %v1721
        %v1735 = vadd.f32 %v1734, %v1723
        %v1736 = vadd.f32 %v1735, %v1725
        %v1737 = vadd.f32 %v1736, %v1727
        %v1738 = vadd.f32 %v1737, %v1729
        %v1739 = vadd.f32 %v1738, %v1731
        %v1740 = vrot.slane %v1739, 4
        %v1741 = vadd.f32 %v1739, %v1740
        %v1742 = vrot.slane %v1741, 2
        %v1743 = vadd.f32 %v1741, %v1742
        %v1744 = vrot.slane %v1743, 1
        %v1745 = vadd.f32 %v1743, %v1744
        %v1746 = vadd.f32 %v1718, %v1720
        %v1747 = vadd.f32 %v1746, %v1722
        %v1748 = vadd.f32 %v1747, %v1724
        %v1749 = vadd.f32 %v1748, %v1726
        %v1750 = vadd.f32 %v1749, %v1728
        %v1751 = vadd.f32 %v1750, %v1730
        %v1752 = vadd.f32 %v1751, %v1732
        %v1753 = vrot.slane %v1752, 4
        %v1754 = vadd.f32 %v1752, %v1753
        %v1755 = vrot.slane %v1754, 2
        %v1756 = vadd.f32 %v1754, %v1755
        %v1757 = vrot.slane %v1756, 1
        %v1758 = vadd.f32 %v1756, %v1757
        %v1759 = vld [vmem:[#allocation2] sm:$0x1]
        %1761 = vset.pattern.permute.xlu0 0
        %1762 = vperm.xlu0 %1761, %v1759
        %v1763 = vpop.permute.xlu0 %1762
        %v1765 = vlaneseq
        %v1766 = vshrl.u32 %v1765, 7
        %v1767 = vsub.s32 0, %v1766
        %v1768 = vrot.slane %v1763, %v1767
        %v1769 = vadd.f32 %v1745, %v1768
        %v1770 = vadd.f32 %v1758, %v1768
        %v1771 = vtanh.pop %v1769
        %v1772 = vtanh.pop %v1770
        %v1773 = vlaneseq
        %v1774 = vand.u32 %v1773, 127
        %v1775 = vadd.s32 %v1774, 128
        %v1776 = vand.u32 %v1774, 127
        %v1777 = vand.u32 %v1775, 127
        %v1778 = vmul.f32 %v1771, 0.0733
        %v1779 = vmul.f32 %v1772, 0.0733
        %1780 = vrot.lane.b32.xlu0 %v1771, 3
        %v1781 = vpop.permute.xlu0 %1780
        %1782 = vrot.lane.b32.xlu0 %v1772, 3
        %v1783 = vpop.permute.xlu0 %1782
        %vm1784 = vcmp.lt.s32.totalorder %v1774, 3
        %v1785 = vsel %vm1784, %v1781, %v1783
        %v1786 = vsel %vm1784, %v1783, %v1781
        %v1787 = vadd.s32 %v1776, 4294967293
        %v1788 = vadd.s32 %v1777, 4294967293
        %vm1789 = vcmp.ge.s32.totalorder %v1787, 0
        %vm1790 = vcmp.ge.s32.totalorder %v1788, 0
        %vm1791 = vcmp.lt.s32.totalorder %v1787, 128
        %vm1792 = vcmp.lt.s32.totalorder %v1788, 128
        %vm1793 = vmand %vm1789, %vm1791
        %vm1794 = vmand %vm1790, %vm1792
        %v1795 = vsel %vm1793, %v1786, 0.0
        %v1796 = vsel %vm1794, %v1785, 0.0
        %v1797 = vmul.f32 %v1795, 0.0099
        %v1798 = vmul.f32 %v1796, 0.0099
        %v1799 = vadd.f32 %v1778, %v1797
        %v1800 = vadd.f32 %v1779, %v1798
        %1801 = vrot.lane.b32.xlu0 %v1771, 2
        %v1802 = vpop.permute.xlu0 %1801
        %1803 = vrot.lane.b32.xlu0 %v1772, 2
        %v1804 = vpop.permute.xlu0 %1803
        %vm1805 = vcmp.lt.s32.totalorder %v1774, 2
        %v1806 = vsel %vm1805, %v1802, %v1804
        %v1807 = vsel %vm1805, %v1804, %v1802
        %v1808 = vadd.s32 %v1776, 4294967294
        %v1809 = vadd.s32 %v1777, 4294967294
        %vm1810 = vcmp.ge.s32.totalorder %v1808, 0
        %vm1811 = vcmp.ge.s32.totalorder %v1809, 0
        %vm1812 = vcmp.lt.s32.totalorder %v1808, 128
        %vm1813 = vcmp.lt.s32.totalorder %v1809, 128
        %vm1814 = vmand %vm1810, %vm1812
        %vm1815 = vmand %vm1811, %vm1813
        %v1816 = vsel %vm1814, %v1807, 0.0
        %v1817 = vsel %vm1815, %v1806, 0.0
        %v1818 = vmul.f32 %v1816, 0.0301
        %v1819 = vmul.f32 %v1817, 0.0301
        %v1820 = vadd.f32 %v1799, %v1818
        %v1821 = vadd.f32 %v1800, %v1819
        %1822 = vrot.lane.b32.xlu0 %v1771, 1
        %v1823 = vpop.permute.xlu0 %1822
        %1824 = vrot.lane.b32.xlu0 %v1772, 1
        %v1825 = vpop.permute.xlu0 %1824
        %vm1826 = vcmp.lt.s32.totalorder %v1774, 1
        %v1827 = vsel %vm1826, %v1823, %v1825
        %v1828 = vsel %vm1826, %v1825, %v1823
        %v1829 = vadd.s32 %v1776, 4294967295
        %v1830 = vadd.s32 %v1777, 4294967295
        %vm1831 = vcmp.ge.s32.totalorder %v1829, 0
        %vm1832 = vcmp.ge.s32.totalorder %v1830, 0
        %vm1833 = vcmp.lt.s32.totalorder %v1829, 128
        %vm1834 = vcmp.lt.s32.totalorder %v1830, 128
        %vm1835 = vmand %vm1831, %vm1833
        %vm1836 = vmand %vm1832, %vm1834
        %v1837 = vsel %vm1835, %v1828, 0.0
        %v1838 = vsel %vm1836, %v1827, 0.0
        %v1839 = vmul.f32 %v1837, 0.0587
        %v1840 = vmul.f32 %v1838, 0.0587
        %v1841 = vadd.f32 %v1820, %v1839
        %v1842 = vadd.f32 %v1821, %v1840
        %1843 = vrot.lane.b32.xlu0 %v1771, 127
        %v1844 = vpop.permute.xlu0 %1843
        %1845 = vrot.lane.b32.xlu0 %v1772, 127
        %v1846 = vpop.permute.xlu0 %1845
        %vm1847 = vcmp.lt.s32.totalorder %v1774, 127
        %v1848 = vsel %vm1847, %v1844, %v1846
        %v1849 = vsel %vm1847, %v1846, %v1844
        %v1850 = vadd.s32 %v1776, 1
        %v1851 = vadd.s32 %v1777, 1
        %vm1852 = vcmp.ge.s32.totalorder %v1850, 0
        %vm1853 = vcmp.ge.s32.totalorder %v1851, 0
        %vm1854 = vcmp.lt.s32.totalorder %v1850, 128
        %vm1855 = vcmp.lt.s32.totalorder %v1851, 128
        %vm1856 = vmand %vm1852, %vm1854
        %vm1857 = vmand %vm1853, %vm1855
        %v1858 = vsel %vm1856, %v1848, 0.0
        %v1859 = vsel %vm1857, %v1849, 0.0
        %v1860 = vmul.f32 %v1858, 0.0587
        %v1861 = vmul.f32 %v1859, 0.0587
        %v1862 = vadd.f32 %v1841, %v1860
        %v1863 = vadd.f32 %v1842, %v1861
        %1864 = vrot.lane.b32.xlu0 %v1771, 126
        %v1865 = vpop.permute.xlu0 %1864
        %1866 = vrot.lane.b32.xlu0 %v1772, 126
        %v1867 = vpop.permute.xlu0 %1866
        %vm1868 = vcmp.lt.s32.totalorder %v1774, 126
        %v1869 = vsel %vm1868, %v1865, %v1867
        %v1870 = vsel %vm1868, %v1867, %v1865
        %v1871 = vadd.s32 %v1776, 2
        %v1872 = vadd.s32 %v1777, 2
        %vm1873 = vcmp.ge.s32.totalorder %v1871, 0
        %vm1874 = vcmp.ge.s32.totalorder %v1872, 0
        %vm1875 = vcmp.lt.s32.totalorder %v1871, 128
        %vm1876 = vcmp.lt.s32.totalorder %v1872, 128
        %vm1877 = vmand %vm1873, %vm1875
        %vm1878 = vmand %vm1874, %vm1876
        %v1879 = vsel %vm1877, %v1869, 0.0
        %v1880 = vsel %vm1878, %v1870, 0.0
        %v1881 = vmul.f32 %v1879, 0.0301
        %v1882 = vmul.f32 %v1880, 0.0301
        %v1883 = vadd.f32 %v1862, %v1881
        %v1884 = vadd.f32 %v1863, %v1882
        %1885 = vrot.lane.b32.xlu0 %v1771, 125
        %v1886 = vpop.permute.xlu0 %1885
        %1887 = vrot.lane.b32.xlu0 %v1772, 125
        %v1888 = vpop.permute.xlu0 %1887
        %vm1889 = vcmp.lt.s32.totalorder %v1774, 125
        %v1890 = vsel %vm1889, %v1886, %v1888
        %v1891 = vsel %vm1889, %v1888, %v1886
        %v1892 = vadd.s32 %v1776, 3
        %v1893 = vadd.s32 %v1777, 3
        %vm1894 = vcmp.ge.s32.totalorder %v1892, 0
        %vm1895 = vcmp.ge.s32.totalorder %v1893, 0
        %vm1896 = vcmp.lt.s32.totalorder %v1892, 128
        %vm1897 = vcmp.lt.s32.totalorder %v1893, 128
        %vm1898 = vmand %vm1894, %vm1896
        %vm1899 = vmand %vm1895, %vm1897
        %v1900 = vsel %vm1898, %v1890, 0.0
        %v1901 = vsel %vm1899, %v1891, 0.0
        %v1902 = vmul.f32 %v1900, 0.0099
        %v1903 = vmul.f32 %v1901, 0.0099
        %v1904 = vadd.f32 %v1883, %v1902
        %v1905 = vadd.f32 %v1884, %v1903
        %v1908 = vcombine.low %v1904, %v1905
        %v1910 = vunpack.c.l.s4 1966171168
        %v1911 = vunpack.c.0.s8 %v1910
        %v1912 = vlaneseq
        %v1913 = vshrl.u32 %v1912, 7
        %v1914 = vsub.s32 %v1911, %v1913
        %v1915 = vrot.slane %v1908, %v1914
        %v1917 = vunpack.c.l.s4 1966171168
        %v1918 = vunpack.c.0.s8 %v1917
        %v1919 = vlaneseq
        %v1920 = vshrl.u32 %v1919, 7
        %v1921 = vsub.s32 %v1918, %v1920
        %v1922 = vrot.slane %v1915, %v1921
        %v1924 = vlaneseq
        %vm1925 = vcmp.ge.s32.totalorder %v1924, 0
        %vm1926 = vcmp.lt.s32.totalorder %v1924, 256
        %vm1927 = vmand %vm1925, %vm1926
        %1928 = vst.msk [vmem:[%s273] sm:$0x3] %vm1927, %v1922
        %s1929 = sand.u32 %s183, 1
        %s1930 = scalar_lea.sflag [#allocation4], %s1929
        %s1931 = sand.u32 %s183, 1
        %s1932 = smul.addr %s1931, 2
        %s1933 = scalar_lea.vmem [#allocation3], %s1932
        // Predicated region
        $region49: #{three_fc_layer_forward.1} parent=47 // pred_check
          %p1934 = pneg %p193
        $region50: #{three_fc_layer_forward.1} parent=47 // pred_check_branch
          %1936 = sbr.rel (%p1934) target = $region52
        $region51: #{three_fc_layer_forward.1} parent=47 // pred_region
          %s1938 = ssub.s32 32, 32
          %1939 = vsyncadd %s1930, %s1938
          %s1940 = smul.addr %s23, 2
          %s1941 = smul.addr %s1940, 16
          %s1942 = scalar_lea.hbm %s7, %s1941
          %s1944 = sshll.u32 %s1933, 4
          %s1945 = int_to_ptr.vmem [resolvable:$true] %s1944
          %1947 = dma.vmem_to_hbm [thread:$0]  %s1945, 32, %s1942, %s1930
        $region52: #{three_fc_layer_forward.1} parent=47 // pred_fallthru
          _
      $region48: #{three_fc_layer_forward.1} parent=5 // pred_fallthru
        _
      %p1948 = scmp.le.s32.totalorder 2, %s18
      // Predicated region
      $region53: #{three_fc_layer_forward.1} parent=5 // pred_check
        %p1949 = pneg %p1948
      $region54: #{three_fc_layer_forward.1} parent=5 // pred_check_branch
        %1951 = sbr.rel (%p1949) target = $region56
      $region55: #{three_fc_layer_forward.1} parent=5 // pred_region
        %s1952 = ssub.s32 %s18, 2
        // Predicated region
        $region57: #{three_fc_layer_forward.1} parent=55 // pred_check
          %p1953 = pneg %p199
        $region58: #{three_fc_layer_forward.1} parent=55 // pred_check_branch
          %1955 = sbr.rel (%p1953) target = $region60
        $region59: #{three_fc_layer_forward.1} parent=55 // pred_region
          %s1956 = sand.u32 %s184, 1
          %s1957 = scalar_lea.sflag [#allocation4], %s1956
          %s1958 = sand.u32 %s184, 1
          %s1959 = smul.addr %s1958, 2
          %s1960 = scalar_lea.vmem [#allocation3], %s1959
          %1961 = dma.done %s1957, 32
        $region60: #{three_fc_layer_forward.1} parent=55 // pred_fallthru
          _
      $region56: #{three_fc_layer_forward.1} parent=5 // pred_fallthru
        _
    $region6: #{three_fc_layer_forward.1} parent=1 // loop_footer
      %s22 = sadd.s32 1, %s18
    $region7: #{three_fc_layer_forward.1} parent=1 // loop_footer_branch
      %17 = sbr.rel target = $region3
    $region8: #{three_fc_layer_forward.1} parent=1 // loop_exit
      _
    %1962 = vsyncpa [#allocation4], 1
    %s1963 = scalar_lea.sflag [#allocation4], 1
    %1964 = vsyncpa %s1963, 1

</llo_original>
